<compile_context>
chip_gen: v5e
topology: v5e:2x2
jax: 0.10.0
libtpu: 0.0.40
codegen_flags: <defaults>
</compile_context>

<pallas_src>
import functools

import jax
import jax.numpy as jnp
from jax.experimental import pallas as pl
from jax.experimental.pallas import tpu as pltpu

HP = 128                      # per-gate lane padding (one vreg lane width)
GATE_PERM = (0, 1, 3, 2)      # PyTorch [i, f, g, o] -> packed [i, f, o, g]


def lstm_fc_kernel(x_ref, wih_ref, whh_ref, b_ref, wfc_ref, bfc_ref, out_ref,
                   *, hidden_pad):
    """x_ref: (T, B) float32 (input_size==1 squeezed); weights pre-padded.

    Gate packing order along the 4*HP axis is [i, f, o, g] so the three
    sigmoid gates are contiguous.
    """
    T, B = x_ref.shape
    HPk = hidden_pad

    x_tb = x_ref[...]                  # (T, B)       f32
    wih = wih_ref[...]                 # (1, 4*HP)    f32, per-gate zero-padded
    whh = whh_ref[...]                 # (HP, 4*HP)   bf16, per-gate zero-padded
    b = b_ref[...]                     # (1, 4*HP)    f32, b_ih + b_hh fused

    # Hoisted input projection for ALL steps (input_size == 1 -> VPU outer
    # product; one shot, off the serial critical path).
    xg_all = x_tb[:, :, None] * wih[None, :, :] + b[None, :, :]   # (T, B, 4*HP)

    h = jnp.zeros((B, HPk), jnp.float32)
    c = jnp.zeros((B, HPk), jnp.float32)

    # Serial recurrence, fully unrolled (T is a static Python int).
    # TODO(synk): for larger H/T, drive the MXU explicitly to keep w_hh
    # resident in weight staging across steps (matmul_push_rhs / acc_lhs).
    for t in range(T):
        # bf16 operands, f32 accumulate -> single-pass MXU on all generations.
        gates = xg_all[t] + jnp.dot(h.astype(jnp.bfloat16), whh,
                                    preferred_element_type=jnp.float32)
        # [i, f, o] sigmoids fused into one EUP dispatch; slices stay on
        # 128-lane vreg boundaries.
        sig = jax.nn.sigmoid(gates[:, :3 * HPk])
        i_g = sig[:, 0 * HPk:1 * HPk]
        f_g = sig[:, 1 * HPk:2 * HPk]
        o_g = sig[:, 2 * HPk:3 * HPk]
        g_g = jnp.tanh(gates[:, 3 * HPk:4 * HPk])
        c = f_g * c + i_g * g_g
        h = o_g * jnp.tanh(c)

    # Final FC (output_size == 1): VPU multiply + XLU cross-lane sum instead of
    # an N=1 MXU matmul. Padded lanes of wfc are zero, so padding contributes 0.
    out_ref[...] = (jnp.sum(h * wfc_ref[...], axis=-1, keepdims=True)
                    + bfc_ref[...])


def prepare_params(params):
    """One-time layout prep: gate reorder [i,f,o,g], transpose, zero-pad each
    gate to HP lanes, fuse biases, bf16-cast the recurrent weight."""
    w_ih = jnp.asarray(params["w_ih"], jnp.float32)   # (4H, I)
    w_hh = jnp.asarray(params["w_hh"], jnp.float32)   # (4H, H)
    bias = (jnp.asarray(params["b_ih"], jnp.float32)
            + jnp.asarray(params["b_hh"], jnp.float32))  # (4H,)
    w_fc = jnp.asarray(params["w_fc"], jnp.float32)   # (O, H)
    b_fc = jnp.asarray(params["b_fc"], jnp.float32)   # (O,)

    four_h, I = w_ih.shape
    H = w_hh.shape[1]
    O = w_fc.shape[0]
    assert I == 1, "kernel specializes the module's input_size == 1"
    assert O == 1, "kernel specializes the module's output_size == 1"
    assert four_h == 4 * H and H <= HP

    perm = jnp.asarray(GATE_PERM)

    # w_ih.T with gate reorder + per-gate zero padding -> (I, 4*HP), f32
    wih_g = w_ih.reshape(4, H, I)[perm]                                   # (4, H, I)
    wih_g = jnp.transpose(wih_g, (2, 0, 1))                               # (I, 4, H)
    wih_t = jnp.zeros((I, 4, HP), jnp.float32).at[:, :, :H].set(wih_g)
    wih_t = wih_t.reshape(I, 4 * HP)

    # w_hh.T with gate reorder, zero-padded h-input rows / gate columns
    # -> (HP, 4*HP), stored bf16 for the MXU (accumulation stays f32 in-kernel).
    whh_g = w_hh.reshape(4, H, H)[perm]                                   # (4, H_out, H_in)
    whh_g = jnp.transpose(whh_g, (2, 0, 1))                               # (H_in, 4, H_out)
    whh_t = jnp.zeros((HP, 4, HP), jnp.float32).at[:H, :, :H].set(whh_g)
    whh_t = whh_t.reshape(HP, 4 * HP).astype(jnp.bfloat16)

    # fused bias with gate reorder + per-gate zero padding -> (1, 4*HP), f32
    b_t = jnp.zeros((4, HP), jnp.float32).at[:, :H].set(bias.reshape(4, H)[perm])
    b_t = b_t.reshape(1, 4 * HP)

    # fc weight as a zero-padded lane row -> (1, HP); bias -> (1, 1)
    wfc_t = jnp.zeros((1, HP), jnp.float32).at[:, :H].set(w_fc)
    bfc_t = b_fc.reshape(1, O)

    return {"wih": wih_t, "whh": whh_t, "b": b_t, "wfc": wfc_t, "bfc": bfc_t}


@jax.jit
def lstm_model_forward(x, prepared):
    """x: (B, T, 1) float32 batch-first, like the PyTorch module."""
    B, T, I = x.shape
    O = prepared["bfc"].shape[1]
    # I == 1 -> (B, T); transpose to (T, B) so per-step slabs are leading-dim
    # picks inside the kernel (tiny XLA transpose, outside the serial chain).
    x_tb = jnp.transpose(x.reshape(B, T)).astype(jnp.float32)

    kernel = functools.partial(lstm_fc_kernel, hidden_pad=HP)
    vmem = pl.BlockSpec(memory_space=pltpu.MemorySpace.VMEM)

    flops = 2 * B * HP * 4 * HP * T + 8 * B * 4 * HP * T + 2 * B * HP
    transcendentals = 5 * B * HP * T
    bytes_accessed = (4 * (x_tb.size + prepared["wih"].size + prepared["b"].size
                           + prepared["wfc"].size + prepared["bfc"].size + B * O)
                      + 2 * prepared["whh"].size)

    return pl.pallas_call(
        kernel,
        out_shape=jax.ShapeDtypeStruct((B, O), jnp.float32),
        in_specs=[vmem] * 6,
        out_specs=vmem,
        cost_estimate=pl.CostEstimate(flops=flops,
                                      transcendentals=transcendentals,
                                      bytes_accessed=bytes_accessed),
    )(x_tb, prepared["wih"], prepared["whh"], prepared["b"],
      prepared["wfc"], prepared["bfc"])


def lstm_model_reference(x, params):
    """Pure-JAX reference with identical PyTorch LSTM + Linear semantics."""
    B, T, _ = x.shape
    H = params["w_hh"].shape[1]
    bias = params["b_ih"] + params["b_hh"]
    h = jnp.zeros((B, H), jnp.float32)
    c = jnp.zeros((B, H), jnp.float32)
    for t in range(T):
        gates = x[:, t, :] @ params["w_ih"].T + h @ params["w_hh"].T + bias
        i = jax.nn.sigmoid(gates[:, 0:H])
        f = jax.nn.sigmoid(gates[:, H:2 * H])
        g = jnp.tanh(gates[:, 2 * H:3 * H])
        o = jax.nn.sigmoid(gates[:, 3 * H:4 * H])
        c = f * c + i * g
        h = o * jnp.tanh(c)
    return h @ params["w_fc"].T + params["b_fc"]


def init_params(key, input_size=1, hidden_size=50, output_size=1):
    """Deterministic init mimicking PyTorch's U(-1/sqrt(H), 1/sqrt(H))."""
    H, I, O = hidden_size, input_size, output_size
    k = 1.0 / jnp.sqrt(jnp.float32(H))
    keys = jax.random.split(key, 6)
    u = lambda kk, shape: jax.random.uniform(kk, shape, jnp.float32, -k, k)
    return {
        "w_ih": u(keys[0], (4 * H, I)),
        "w_hh": u(keys[1], (4 * H, H)),
        "b_ih": u(keys[2], (4 * H,)),
        "b_hh": u(keys[3], (4 * H,)),
        "w_fc": u(keys[4], (O, H)),
        "b_fc": u(keys[5], (O,)),
    }


if __name__ == "__main__":
    key = jax.random.PRNGKey(0)
    pkey, xkey = jax.random.split(key)

    B, T, I, H, O = 2, 8, 1, 50, 1
    params = init_params(pkey, input_size=I, hidden_size=H, output_size=O)
    prepared = prepare_params(params)          # one-time layout prep
    x = jax.random.normal(xkey, (B, T, I), jnp.float32)   # batch-first input

    out = jax.block_until_ready(lstm_model_forward(x, prepared))
    assert out.shape == (B, O), out.shape
    assert bool(jnp.all(jnp.isfinite(out)))

    # bf16 recurrent-matmul operands -> loosen tolerance (f32 accumulate keeps
    # the error at the bf16 input-rounding level, ~0.4% relative).
    ref = lstm_model_reference(x, params)
    assert bool(jnp.allclose(out, ref, atol=2e-2, rtol=2e-2)), (out, ref)

    print("KERNEL_OK")
</pallas_src>

<mosaic_0001>
module attributes {stable_mosaic.version = 11 : i64} {
  func.func @lstm_fc_kernel(%arg0: memref<8x2xf32, #tpu.memory_space<vmem>>, %arg1: memref<1x512xf32, #tpu.memory_space<vmem>>, %arg2: memref<128x512xbf16, #tpu.memory_space<vmem>>, %arg3: memref<1x512xf32, #tpu.memory_space<vmem>>, %arg4: memref<1x128xf32, #tpu.memory_space<vmem>>, %arg5: memref<1x1xf32, #tpu.memory_space<vmem>>, %arg6: memref<2x1xf32, #tpu.memory_space<vmem>>) attributes {dimension_semantics = [], scalar_prefetch = 0 : i64, scratch_operands = 0 : i64, tpu.core_type = #tpu.core_type<tc>} {
    %c0 = arith.constant 0 : index
    %c0_0 = arith.constant 0 : index
    %0 = vector.load %arg0[%c0, %c0_0] : memref<8x2xf32, #tpu.memory_space<vmem>>, vector<8x2xf32>
    %c0_1 = arith.constant 0 : index
    %c0_2 = arith.constant 0 : index
    %1 = vector.load %arg1[%c0_1, %c0_2] : memref<1x512xf32, #tpu.memory_space<vmem>>, vector<1x512xf32>
    %c0_3 = arith.constant 0 : index
    %c0_4 = arith.constant 0 : index
    %2 = vector.load %arg2[%c0_3, %c0_4] : memref<128x512xbf16, #tpu.memory_space<vmem>>, vector<128x512xbf16>
    %c0_5 = arith.constant 0 : index
    %c0_6 = arith.constant 0 : index
    %3 = vector.load %arg3[%c0_5, %c0_6] : memref<1x512xf32, #tpu.memory_space<vmem>>, vector<1x512xf32>
    %4 = vector.shape_cast %0 : vector<8x2xf32> to vector<8x2x1xf32>
    %5 = vector.shape_cast %1 : vector<1x512xf32> to vector<1x1x512xf32>
    %6 = vector.broadcast %4 : vector<8x2x1xf32> to vector<8x2x512xf32>
    %7 = vector.broadcast %5 : vector<1x1x512xf32> to vector<8x2x512xf32>
    %8 = arith.mulf %6, %7 : vector<8x2x512xf32>
    %9 = vector.shape_cast %3 : vector<1x512xf32> to vector<1x1x512xf32>
    %10 = vector.broadcast %9 : vector<1x1x512xf32> to vector<8x2x512xf32>
    %11 = arith.addf %8, %10 : vector<8x2x512xf32>
    %cst = arith.constant 0.000000e+00 : f32
    %12 = vector.broadcast %cst : f32 to vector<2x128xf32>
    %cst_7 = arith.constant 0.000000e+00 : f32
    %13 = vector.broadcast %cst_7 : f32 to vector<2x128xf32>
    %14 = vector.extract_strided_slice %11 {offsets = [0, 0, 0], sizes = [1, 2, 512], strides = [1, 1, 1]} : vector<8x2x512xf32> to vector<1x2x512xf32>
    %15 = vector.shape_cast %14 : vector<1x2x512xf32> to vector<2x512xf32>
    %16 = arith.truncf %12 : vector<2x128xf32> to vector<2x128xbf16>
    %cst_8 = arith.constant dense<0.000000e+00> : vector<2x512xf32>
    %17 = tpu.matmul %16, %2, %cst_8 {dimension_numbers = #tpu.dot_dimension_numbers<[1], [0], [0], [1], [0, 0, 1, 1], [], []>} : vector<2x128xbf16>, vector<128x512xbf16>, vector<2x512xf32> -> vector<2x512xf32>
    %18 = arith.addf %15, %17 : vector<2x512xf32>
    %19 = vector.extract_strided_slice %18 {offsets = [0, 0], sizes = [2, 384], strides = [1, 1]} : vector<2x512xf32> to vector<2x384xf32>
    %20 = arith.negf %19 : vector<2x384xf32>
    %21 = math.exp %20 : vector<2x384xf32>
    %cst_9 = arith.constant 1.000000e+00 : f32
    %22 = vector.broadcast %cst_9 : f32 to vector<2x384xf32>
    %23 = arith.addf %22, %21 : vector<2x384xf32>
    %24 = arith.divf %22, %23 : vector<2x384xf32>
    %25 = vector.extract_strided_slice %24 {offsets = [0, 0], sizes = [2, 128], strides = [1, 1]} : vector<2x384xf32> to vector<2x128xf32>
    %26 = vector.extract_strided_slice %24 {offsets = [0, 128], sizes = [2, 128], strides = [1, 1]} : vector<2x384xf32> to vector<2x128xf32>
    %27 = vector.extract_strided_slice %24 {offsets = [0, 256], sizes = [2, 128], strides = [1, 1]} : vector<2x384xf32> to vector<2x128xf32>
    %28 = vector.extract_strided_slice %18 {offsets = [0, 384], sizes = [2, 128], strides = [1, 1]} : vector<2x512xf32> to vector<2x128xf32>
    %29 = math.tanh %28 : vector<2x128xf32>
    %30 = arith.mulf %26, %13 : vector<2x128xf32>
    %31 = arith.mulf %25, %29 : vector<2x128xf32>
    %32 = arith.addf %30, %31 : vector<2x128xf32>
    %33 = math.tanh %32 : vector<2x128xf32>
    %34 = arith.mulf %27, %33 : vector<2x128xf32>
    %35 = vector.extract_strided_slice %11 {offsets = [1, 0, 0], sizes = [1, 2, 512], strides = [1, 1, 1]} : vector<8x2x512xf32> to vector<1x2x512xf32>
    %36 = vector.shape_cast %35 : vector<1x2x512xf32> to vector<2x512xf32>
    %37 = arith.truncf %34 : vector<2x128xf32> to vector<2x128xbf16>
    %cst_10 = arith.constant dense<0.000000e+00> : vector<2x512xf32>
    %38 = tpu.matmul %37, %2, %cst_10 {dimension_numbers = #tpu.dot_dimension_numbers<[1], [0], [0], [1], [0, 0, 1, 1], [], []>} : vector<2x128xbf16>, vector<128x512xbf16>, vector<2x512xf32> -> vector<2x512xf32>
    %39 = arith.addf %36, %38 : vector<2x512xf32>
    %40 = vector.extract_strided_slice %39 {offsets = [0, 0], sizes = [2, 384], strides = [1, 1]} : vector<2x512xf32> to vector<2x384xf32>
    %41 = arith.negf %40 : vector<2x384xf32>
    %42 = math.exp %41 : vector<2x384xf32>
    %cst_11 = arith.constant 1.000000e+00 : f32
    %43 = vector.broadcast %cst_11 : f32 to vector<2x384xf32>
    %44 = arith.addf %43, %42 : vector<2x384xf32>
    %45 = arith.divf %43, %44 : vector<2x384xf32>
    %46 = vector.extract_strided_slice %45 {offsets = [0, 0], sizes = [2, 128], strides = [1, 1]} : vector<2x384xf32> to vector<2x128xf32>
    %47 = vector.extract_strided_slice %45 {offsets = [0, 128], sizes = [2, 128], strides = [1, 1]} : vector<2x384xf32> to vector<2x128xf32>
    %48 = vector.extract_strided_slice %45 {offsets = [0, 256], sizes = [2, 128], strides = [1, 1]} : vector<2x384xf32> to vector<2x128xf32>
    %49 = vector.extract_strided_slice %39 {offsets = [0, 384], sizes = [2, 128], strides = [1, 1]} : vector<2x512xf32> to vector<2x128xf32>
    %50 = math.tanh %49 : vector<2x128xf32>
    %51 = arith.mulf %47, %32 : vector<2x128xf32>
    %52 = arith.mulf %46, %50 : vector<2x128xf32>
    %53 = arith.addf %51, %52 : vector<2x128xf32>
    %54 = math.tanh %53 : vector<2x128xf32>
    %55 = arith.mulf %48, %54 : vector<2x128xf32>
    %56 = vector.extract_strided_slice %11 {offsets = [2, 0, 0], sizes = [1, 2, 512], strides = [1, 1, 1]} : vector<8x2x512xf32> to vector<1x2x512xf32>
    %57 = vector.shape_cast %56 : vector<1x2x512xf32> to vector<2x512xf32>
    %58 = arith.truncf %55 : vector<2x128xf32> to vector<2x128xbf16>
    %cst_12 = arith.constant dense<0.000000e+00> : vector<2x512xf32>
    %59 = tpu.matmul %58, %2, %cst_12 {dimension_numbers = #tpu.dot_dimension_numbers<[1], [0], [0], [1], [0, 0, 1, 1], [], []>} : vector<2x128xbf16>, vector<128x512xbf16>, vector<2x512xf32> -> vector<2x512xf32>
    %60 = arith.addf %57, %59 : vector<2x512xf32>
    %61 = vector.extract_strided_slice %60 {offsets = [0, 0], sizes = [2, 384], strides = [1, 1]} : vector<2x512xf32> to vector<2x384xf32>
    %62 = arith.negf %61 : vector<2x384xf32>
    %63 = math.exp %62 : vector<2x384xf32>
    %cst_13 = arith.constant 1.000000e+00 : f32
    %64 = vector.broadcast %cst_13 : f32 to vector<2x384xf32>
    %65 = arith.addf %64, %63 : vector<2x384xf32>
    %66 = arith.divf %64, %65 : vector<2x384xf32>
    %67 = vector.extract_strided_slice %66 {offsets = [0, 0], sizes = [2, 128], strides = [1, 1]} : vector<2x384xf32> to vector<2x128xf32>
    %68 = vector.extract_strided_slice %66 {offsets = [0, 128], sizes = [2, 128], strides = [1, 1]} : vector<2x384xf32> to vector<2x128xf32>
    %69 = vector.extract_strided_slice %66 {offsets = [0, 256], sizes = [2, 128], strides = [1, 1]} : vector<2x384xf32> to vector<2x128xf32>
    %70 = vector.extract_strided_slice %60 {offsets = [0, 384], sizes = [2, 128], strides = [1, 1]} : vector<2x512xf32> to vector<2x128xf32>
    %71 = math.tanh %70 : vector<2x128xf32>
    %72 = arith.mulf %68, %53 : vector<2x128xf32>
    %73 = arith.mulf %67, %71 : vector<2x128xf32>
    %74 = arith.addf %72, %73 : vector<2x128xf32>
    %75 = math.tanh %74 : vector<2x128xf32>
    %76 = arith.mulf %69, %75 : vector<2x128xf32>
    %77 = vector.extract_strided_slice %11 {offsets = [3, 0, 0], sizes = [1, 2, 512], strides = [1, 1, 1]} : vector<8x2x512xf32> to vector<1x2x512xf32>
    %78 = vector.shape_cast %77 : vector<1x2x512xf32> to vector<2x512xf32>
    %79 = arith.truncf %76 : vector<2x128xf32> to vector<2x128xbf16>
    %cst_14 = arith.constant dense<0.000000e+00> : vector<2x512xf32>
    %80 = tpu.matmul %79, %2, %cst_14 {dimension_numbers = #tpu.dot_dimension_numbers<[1], [0], [0], [1], [0, 0, 1, 1], [], []>} : vector<2x128xbf16>, vector<128x512xbf16>, vector<2x512xf32> -> vector<2x512xf32>
    %81 = arith.addf %78, %80 : vector<2x512xf32>
    %82 = vector.extract_strided_slice %81 {offsets = [0, 0], sizes = [2, 384], strides = [1, 1]} : vector<2x512xf32> to vector<2x384xf32>
    %83 = arith.negf %82 : vector<2x384xf32>
    %84 = math.exp %83 : vector<2x384xf32>
    %cst_15 = arith.constant 1.000000e+00 : f32
    %85 = vector.broadcast %cst_15 : f32 to vector<2x384xf32>
    %86 = arith.addf %85, %84 : vector<2x384xf32>
    %87 = arith.divf %85, %86 : vector<2x384xf32>
    %88 = vector.extract_strided_slice %87 {offsets = [0, 0], sizes = [2, 128], strides = [1, 1]} : vector<2x384xf32> to vector<2x128xf32>
    %89 = vector.extract_strided_slice %87 {offsets = [0, 128], sizes = [2, 128], strides = [1, 1]} : vector<2x384xf32> to vector<2x128xf32>
    %90 = vector.extract_strided_slice %87 {offsets = [0, 256], sizes = [2, 128], strides = [1, 1]} : vector<2x384xf32> to vector<2x128xf32>
    %91 = vector.extract_strided_slice %81 {offsets = [0, 384], sizes = [2, 128], strides = [1, 1]} : vector<2x512xf32> to vector<2x128xf32>
    %92 = math.tanh %91 : vector<2x128xf32>
    %93 = arith.mulf %89, %74 : vector<2x128xf32>
    %94 = arith.mulf %88, %92 : vector<2x128xf32>
    %95 = arith.addf %93, %94 : vector<2x128xf32>
    %96 = math.tanh %95 : vector<2x128xf32>
    %97 = arith.mulf %90, %96 : vector<2x128xf32>
    %98 = vector.extract_strided_slice %11 {offsets = [4, 0, 0], sizes = [1, 2, 512], strides = [1, 1, 1]} : vector<8x2x512xf32> to vector<1x2x512xf32>
    %99 = vector.shape_cast %98 : vector<1x2x512xf32> to vector<2x512xf32>
    %100 = arith.truncf %97 : vector<2x128xf32> to vector<2x128xbf16>
    %cst_16 = arith.constant dense<0.000000e+00> : vector<2x512xf32>
    %101 = tpu.matmul %100, %2, %cst_16 {dimension_numbers = #tpu.dot_dimension_numbers<[1], [0], [0], [1], [0, 0, 1, 1], [], []>} : vector<2x128xbf16>, vector<128x512xbf16>, vector<2x512xf32> -> vector<2x512xf32>
    %102 = arith.addf %99, %101 : vector<2x512xf32>
    %103 = vector.extract_strided_slice %102 {offsets = [0, 0], sizes = [2, 384], strides = [1, 1]} : vector<2x512xf32> to vector<2x384xf32>
    %104 = arith.negf %103 : vector<2x384xf32>
    %105 = math.exp %104 : vector<2x384xf32>
    %cst_17 = arith.constant 1.000000e+00 : f32
    %106 = vector.broadcast %cst_17 : f32 to vector<2x384xf32>
    %107 = arith.addf %106, %105 : vector<2x384xf32>
    %108 = arith.divf %106, %107 : vector<2x384xf32>
    %109 = vector.extract_strided_slice %108 {offsets = [0, 0], sizes = [2, 128], strides = [1, 1]} : vector<2x384xf32> to vector<2x128xf32>
    %110 = vector.extract_strided_slice %108 {offsets = [0, 128], sizes = [2, 128], strides = [1, 1]} : vector<2x384xf32> to vector<2x128xf32>
    %111 = vector.extract_strided_slice %108 {offsets = [0, 256], sizes = [2, 128], strides = [1, 1]} : vector<2x384xf32> to vector<2x128xf32>
    %112 = vector.extract_strided_slice %102 {offsets = [0, 384], sizes = [2, 128], strides = [1, 1]} : vector<2x512xf32> to vector<2x128xf32>
    %113 = math.tanh %112 : vector<2x128xf32>
    %114 = arith.mulf %110, %95 : vector<2x128xf32>
    %115 = arith.mulf %109, %113 : vector<2x128xf32>
    %116 = arith.addf %114, %115 : vector<2x128xf32>
    %117 = math.tanh %116 : vector<2x128xf32>
    %118 = arith.mulf %111, %117 : vector<2x128xf32>
    %119 = vector.extract_strided_slice %11 {offsets = [5, 0, 0], sizes = [1, 2, 512], strides = [1, 1, 1]} : vector<8x2x512xf32> to vector<1x2x512xf32>
    %120 = vector.shape_cast %119 : vector<1x2x512xf32> to vector<2x512xf32>
    %121 = arith.truncf %118 : vector<2x128xf32> to vector<2x128xbf16>
    %cst_18 = arith.constant dense<0.000000e+00> : vector<2x512xf32>
    %122 = tpu.matmul %121, %2, %cst_18 {dimension_numbers = #tpu.dot_dimension_numbers<[1], [0], [0], [1], [0, 0, 1, 1], [], []>} : vector<2x128xbf16>, vector<128x512xbf16>, vector<2x512xf32> -> vector<2x512xf32>
    %123 = arith.addf %120, %122 : vector<2x512xf32>
    %124 = vector.extract_strided_slice %123 {offsets = [0, 0], sizes = [2, 384], strides = [1, 1]} : vector<2x512xf32> to vector<2x384xf32>
    %125 = arith.negf %124 : vector<2x384xf32>
    %126 = math.exp %125 : vector<2x384xf32>
    %cst_19 = arith.constant 1.000000e+00 : f32
    %127 = vector.broadcast %cst_19 : f32 to vector<2x384xf32>
    %128 = arith.addf %127, %126 : vector<2x384xf32>
    %129 = arith.divf %127, %128 : vector<2x384xf32>
    %130 = vector.extract_strided_slice %129 {offsets = [0, 0], sizes = [2, 128], strides = [1, 1]} : vector<2x384xf32> to vector<2x128xf32>
    %131 = vector.extract_strided_slice %129 {offsets = [0, 128], sizes = [2, 128], strides = [1, 1]} : vector<2x384xf32> to vector<2x128xf32>
    %132 = vector.extract_strided_slice %129 {offsets = [0, 256], sizes = [2, 128], strides = [1, 1]} : vector<2x384xf32> to vector<2x128xf32>
    %133 = vector.extract_strided_slice %123 {offsets = [0, 384], sizes = [2, 128], strides = [1, 1]} : vector<2x512xf32> to vector<2x128xf32>
    %134 = math.tanh %133 : vector<2x128xf32>
    %135 = arith.mulf %131, %116 : vector<2x128xf32>
    %136 = arith.mulf %130, %134 : vector<2x128xf32>
    %137 = arith.addf %135, %136 : vector<2x128xf32>
    %138 = math.tanh %137 : vector<2x128xf32>
    %139 = arith.mulf %132, %138 : vector<2x128xf32>
    %140 = vector.extract_strided_slice %11 {offsets = [6, 0, 0], sizes = [1, 2, 512], strides = [1, 1, 1]} : vector<8x2x512xf32> to vector<1x2x512xf32>
    %141 = vector.shape_cast %140 : vector<1x2x512xf32> to vector<2x512xf32>
    %142 = arith.truncf %139 : vector<2x128xf32> to vector<2x128xbf16>
    %cst_20 = arith.constant dense<0.000000e+00> : vector<2x512xf32>
    %143 = tpu.matmul %142, %2, %cst_20 {dimension_numbers = #tpu.dot_dimension_numbers<[1], [0], [0], [1], [0, 0, 1, 1], [], []>} : vector<2x128xbf16>, vector<128x512xbf16>, vector<2x512xf32> -> vector<2x512xf32>
    %144 = arith.addf %141, %143 : vector<2x512xf32>
    %145 = vector.extract_strided_slice %144 {offsets = [0, 0], sizes = [2, 384], strides = [1, 1]} : vector<2x512xf32> to vector<2x384xf32>
    %146 = arith.negf %145 : vector<2x384xf32>
    %147 = math.exp %146 : vector<2x384xf32>
    %cst_21 = arith.constant 1.000000e+00 : f32
    %148 = vector.broadcast %cst_21 : f32 to vector<2x384xf32>
    %149 = arith.addf %148, %147 : vector<2x384xf32>
    %150 = arith.divf %148, %149 : vector<2x384xf32>
    %151 = vector.extract_strided_slice %150 {offsets = [0, 0], sizes = [2, 128], strides = [1, 1]} : vector<2x384xf32> to vector<2x128xf32>
    %152 = vector.extract_strided_slice %150 {offsets = [0, 128], sizes = [2, 128], strides = [1, 1]} : vector<2x384xf32> to vector<2x128xf32>
    %153 = vector.extract_strided_slice %150 {offsets = [0, 256], sizes = [2, 128], strides = [1, 1]} : vector<2x384xf32> to vector<2x128xf32>
    %154 = vector.extract_strided_slice %144 {offsets = [0, 384], sizes = [2, 128], strides = [1, 1]} : vector<2x512xf32> to vector<2x128xf32>
    %155 = math.tanh %154 : vector<2x128xf32>
    %156 = arith.mulf %152, %137 : vector<2x128xf32>
    %157 = arith.mulf %151, %155 : vector<2x128xf32>
    %158 = arith.addf %156, %157 : vector<2x128xf32>
    %159 = math.tanh %158 : vector<2x128xf32>
    %160 = arith.mulf %153, %159 : vector<2x128xf32>
    %161 = vector.extract_strided_slice %11 {offsets = [7, 0, 0], sizes = [1, 2, 512], strides = [1, 1, 1]} : vector<8x2x512xf32> to vector<1x2x512xf32>
    %162 = vector.shape_cast %161 : vector<1x2x512xf32> to vector<2x512xf32>
    %163 = arith.truncf %160 : vector<2x128xf32> to vector<2x128xbf16>
    %cst_22 = arith.constant dense<0.000000e+00> : vector<2x512xf32>
    %164 = tpu.matmul %163, %2, %cst_22 {dimension_numbers = #tpu.dot_dimension_numbers<[1], [0], [0], [1], [0, 0, 1, 1], [], []>} : vector<2x128xbf16>, vector<128x512xbf16>, vector<2x512xf32> -> vector<2x512xf32>
    %165 = arith.addf %162, %164 : vector<2x512xf32>
    %166 = vector.extract_strided_slice %165 {offsets = [0, 0], sizes = [2, 384], strides = [1, 1]} : vector<2x512xf32> to vector<2x384xf32>
    %167 = arith.negf %166 : vector<2x384xf32>
    %168 = math.exp %167 : vector<2x384xf32>
    %cst_23 = arith.constant 1.000000e+00 : f32
    %169 = vector.broadcast %cst_23 : f32 to vector<2x384xf32>
    %170 = arith.addf %169, %168 : vector<2x384xf32>
    %171 = arith.divf %169, %170 : vector<2x384xf32>
    %172 = vector.extract_strided_slice %171 {offsets = [0, 0], sizes = [2, 128], strides = [1, 1]} : vector<2x384xf32> to vector<2x128xf32>
    %173 = vector.extract_strided_slice %171 {offsets = [0, 128], sizes = [2, 128], strides = [1, 1]} : vector<2x384xf32> to vector<2x128xf32>
    %174 = vector.extract_strided_slice %171 {offsets = [0, 256], sizes = [2, 128], strides = [1, 1]} : vector<2x384xf32> to vector<2x128xf32>
    %175 = vector.extract_strided_slice %165 {offsets = [0, 384], sizes = [2, 128], strides = [1, 1]} : vector<2x512xf32> to vector<2x128xf32>
    %176 = math.tanh %175 : vector<2x128xf32>
    %177 = arith.mulf %173, %158 : vector<2x128xf32>
    %178 = arith.mulf %172, %176 : vector<2x128xf32>
    %179 = arith.addf %177, %178 : vector<2x128xf32>
    %180 = math.tanh %179 : vector<2x128xf32>
    %181 = arith.mulf %174, %180 : vector<2x128xf32>
    %c0_24 = arith.constant 0 : index
    %c0_25 = arith.constant 0 : index
    %182 = vector.load %arg4[%c0_24, %c0_25] : memref<1x128xf32, #tpu.memory_space<vmem>>, vector<1x128xf32>
    %183 = vector.broadcast %182 : vector<1x128xf32> to vector<2x128xf32>
    %184 = arith.mulf %181, %183 : vector<2x128xf32>
    %cst_26 = arith.constant dense<0.000000e+00> : vector<2xf32>
    %185 = vector.multi_reduction <add>, %184, %cst_26 [1] : vector<2x128xf32> to vector<2xf32>
    %186 = vector.shape_cast %185 : vector<2xf32> to vector<2x1xf32>
    %c0_27 = arith.constant 0 : index
    %c0_28 = arith.constant 0 : index
    %187 = vector.load %arg5[%c0_27, %c0_28] : memref<1x1xf32, #tpu.memory_space<vmem>>, vector<1x1xf32>
    %188 = vector.broadcast %187 : vector<1x1xf32> to vector<2x1xf32>
    %189 = arith.addf %186, %188 : vector<2x1xf32>
    %c0_29 = arith.constant 0 : index
    %c0_30 = arith.constant 0 : index
    %190 = vector.load %arg6[%c0_29, %c0_30] : memref<2x1xf32, #tpu.memory_space<vmem>>, vector<2x1xf32>
    tpu.vector_store %arg6[%c0_29, %c0_30], %189 {strides = array<i32>} : memref<2x1xf32, #tpu.memory_space<vmem>>, vector<2x1xf32>,
    return
  }
}

</mosaic_0001>

<llo_original>
// kernel: lstm_model_forward.1
$region0: #{lstm_model_forward.1}
  #allocation0 [shape = 'u32[]', space=smem, size = 0x4, offset = 0x4, fixed_abs, tag = 'smem constant byte address 0x4 - core index']
  #allocation1 [shape = 'u32[72,128]{1,0:T(1,128)}', space=vmem, size = 0x9000, scoped, tag = 'internal scratch']
  #allocation2 [shape = 'f32[1,1]{1,0:T(1,128)S(1)}', space=vmem, size = 0x200, scoped, tag = 'scoped memory for lstm_model_forward.1']
  %s0 = inlined_call_operand.vmem [shape: f32[8,2], index: 0, kind: input, shape index: {}]
  %s1 = inlined_call_operand.vmem [shape: f32[1,512], index: 1, kind: input, shape index: {}]
  %s2 = inlined_call_operand.hbm [shape: bf16[128,512], index: 2, kind: input, shape index: {}]
  %s3 = inlined_call_operand.vmem [shape: f32[1,512], index: 3, kind: input, shape index: {}]
  %s4 = inlined_call_operand.vmem [shape: f32[1,128], index: 4, kind: input, shape index: {}]
  %s5 = inlined_call_operand.<no memory space> [shape: f32[1,1], index: 5, kind: input, shape index: {}]
  %s6 = inlined_call_operand.vmem [shape: f32[2,1], index: 6, kind: output, shape index: {}]
  %s7 = sld [smem:[#allocation0]]
  $region38: #{lstm_model_forward.1} parent=0
    _
  %s9 = ssub.s32 1, %s7
  %s10 = scalar_select 0, %s9, %s7
  %v11 = vstv %s5
  %12 = vst [vmem:[#allocation2] sm:$0x1] %v11
  $region1: #{lstm_model_forward.1} parent=0
    #allocation3 [shape = 'u8[131072]{0}', space=vmem, size = 0x20000, scoped, tag = 'input window, operand 2, single buffered']
    #allocation4 [shape = 's32[1]{0}', space=sflag, size = 0x4, scoped, tag = 'scoped memory for lstm_model_forward.1']
    %13 = vsyncpa [#allocation4], 0
    // Predicated region
    $region2: #{lstm_model_forward.1} parent=1 // pred_check
      _
    $region3: #{lstm_model_forward.1} parent=1 // pred_check_branch
      %15 = sbr.rel (0) target = $region5
    $region4: #{lstm_model_forward.1} parent=1 // pred_region
      _
    $region5: #{lstm_model_forward.1} parent=1 // pred_fallthru
      _
    // Predicated region
    $region6: #{lstm_model_forward.1} parent=1 // pred_check
      _
    $region7: #{lstm_model_forward.1} parent=1 // pred_check_branch
      %17 = sbr.rel (0) target = $region9
    $region8: #{lstm_model_forward.1} parent=1 // pred_region
      _
    $region9: #{lstm_model_forward.1} parent=1 // pred_fallthru
      _
    // Predicated region
    $region10: #{lstm_model_forward.1} parent=1 // pred_check
      _
    $region11: #{lstm_model_forward.1} parent=1 // pred_check_branch
      %19 = sbr.rel (0) target = $region13
    $region12: #{lstm_model_forward.1} parent=1 // pred_region
      %21 = vsyncadd [#allocation4], 0
      %s22 = sshll.u32 %s2, 4
      %s23 = int_to_ptr.hbm [resolvable:$true] %s22
      %s24 = sshll.u32 [#allocation3], 4
      %s25 = int_to_ptr.vmem [resolvable:$true] %s24
      %30 = dma.hbm_to_vmem [thread:$0]  %s23, 4096, %s25, [#allocation4], 256, 256, 16
    $region13: #{lstm_model_forward.1} parent=1 // pred_fallthru
      _
    // Predicated region
    $region14: #{lstm_model_forward.1} parent=1 // pred_check
      _
    $region15: #{lstm_model_forward.1} parent=1 // pred_check_branch
      %32 = sbr.rel (0) target = $region17
    $region16: #{lstm_model_forward.1} parent=1 // pred_region
      _
    $region17: #{lstm_model_forward.1} parent=1 // pred_fallthru
      _
    // Predicated region
    $region18: #{lstm_model_forward.1} parent=1 // pred_check
      _
    $region19: #{lstm_model_forward.1} parent=1 // pred_check_branch
      %34 = sbr.rel (0) target = $region21
    $region20: #{lstm_model_forward.1} parent=1 // pred_region
      _
    $region21: #{lstm_model_forward.1} parent=1 // pred_fallthru
      _
    // Predicated region
    $region22: #{lstm_model_forward.1} parent=1 // pred_check
      _
    $region23: #{lstm_model_forward.1} parent=1 // pred_check_branch
      %36 = sbr.rel (0) target = $region25
    $region24: #{lstm_model_forward.1} parent=1 // pred_region
      _
    $region25: #{lstm_model_forward.1} parent=1 // pred_fallthru
      _
    // Predicated region
    $region26: #{lstm_model_forward.1} parent=1 // pred_check
      _
    $region27: #{lstm_model_forward.1} parent=1 // pred_check_branch
      %38 = sbr.rel (0) target = $region29
    $region28: #{lstm_model_forward.1} parent=1 // pred_region
      %40 = dma.done [#allocation4], 4096
    $region29: #{lstm_model_forward.1} parent=1 // pred_fallthru
      _
    %v42 = vld [vmem:[%s0] sm:$0xff]
    %v43 = vld [vmem:[%s1] sm:$0xf]
    %v44 = vld [vmem:[#allocation3] sm:$0xff]
    %v45 = vld [vmem:[#allocation3 + $0x8] sm:$0xff]
    %v46 = vld [vmem:[#allocation3 + $0x10] sm:$0xff]
    %v47 = vld [vmem:[#allocation3 + $0x18] sm:$0xff]
    %v48 = vld [vmem:[#allocation3 + $0x20] sm:$0xff]
    %v49 = vld [vmem:[#allocation3 + $0x28] sm:$0xff]
    %v50 = vld [vmem:[#allocation3 + $0x30] sm:$0xff]
    %v51 = vld [vmem:[#allocation3 + $0x38] sm:$0xff]
    %v52 = vld [vmem:[#allocation3 + $0x40] sm:$0xff]
    %v53 = vld [vmem:[#allocation3 + $0x48] sm:$0xff]
    %v54 = vld [vmem:[#allocation3 + $0x50] sm:$0xff]
    %v55 = vld [vmem:[#allocation3 + $0x58] sm:$0xff]
    %v56 = vld [vmem:[#allocation3 + $0x60] sm:$0xff]
    %v57 = vld [vmem:[#allocation3 + $0x68] sm:$0xff]
    %v58 = vld [vmem:[#allocation3 + $0x70] sm:$0xff]
    %v59 = vld [vmem:[#allocation3 + $0x78] sm:$0xff]
    %v60 = vld [vmem:[#allocation3 + $0x80] sm:$0xff]
    %v61 = vld [vmem:[#allocation3 + $0x88] sm:$0xff]
    %v62 = vld [vmem:[#allocation3 + $0x90] sm:$0xff]
    %v63 = vld [vmem:[#allocation3 + $0x98] sm:$0xff]
    %v64 = vld [vmem:[#allocation3 + $0xa0] sm:$0xff]
    %v65 = vld [vmem:[#allocation3 + $0xa8] sm:$0xff]
    %v66 = vld [vmem:[#allocation3 + $0xb0] sm:$0xff]
    %v67 = vld [vmem:[#allocation3 + $0xb8] sm:$0xff]
    %v68 = vld [vmem:[#allocation3 + $0xc0] sm:$0xff]
    %v69 = vld [vmem:[#allocation3 + $0xc8] sm:$0xff]
    %v70 = vld [vmem:[#allocation3 + $0xd0] sm:$0xff]
    %v71 = vld [vmem:[#allocation3 + $0xd8] sm:$0xff]
    %v72 = vld [vmem:[#allocation3 + $0xe0] sm:$0xff]
    %v73 = vld [vmem:[#allocation3 + $0xe8] sm:$0xff]
    %v74 = vld [vmem:[#allocation3 + $0xf0] sm:$0xff]
    %v75 = vld [vmem:[#allocation3 + $0xf8] sm:$0xff]
    %v76 = vld [vmem:[%s3] sm:$0xf]
    %v77 = vperm.slane %v42, 0
    %v78 = vlaneseq
    %v79 = vshrl.u32 %v78, 7
    %81 = vset.pattern.permute.xlu0 %v79
    %82 = vperm.xlu0 %81, %v77
    %v83 = vpop.permute.xlu0 %82
    %v84 = vperm.slane %v42, 1
    %v85 = vlaneseq
    %v86 = vshrl.u32 %v85, 7
    %88 = vset.pattern.permute.xlu0 %v86
    %89 = vperm.xlu0 %88, %v84
    %v90 = vpop.permute.xlu0 %89
    %v91 = vperm.slane %v42, 2
    %v92 = vlaneseq
    %v93 = vshrl.u32 %v92, 7
    %95 = vset.pattern.permute.xlu0 %v93
    %96 = vperm.xlu0 %95, %v91
    %v97 = vpop.permute.xlu0 %96
    %v98 = vperm.slane %v42, 3
    %v99 = vlaneseq
    %v100 = vshrl.u32 %v99, 7
    %102 = vset.pattern.permute.xlu0 %v100
    %103 = vperm.xlu0 %102, %v98
    %v104 = vpop.permute.xlu0 %103
    %v105 = vperm.slane %v42, 4
    %v106 = vlaneseq
    %v107 = vshrl.u32 %v106, 7
    %109 = vset.pattern.permute.xlu0 %v107
    %110 = vperm.xlu0 %109, %v105
    %v111 = vpop.permute.xlu0 %110
    %v112 = vperm.slane %v42, 5
    %v113 = vlaneseq
    %v114 = vshrl.u32 %v113, 7
    %116 = vset.pattern.permute.xlu0 %v114
    %117 = vperm.xlu0 %116, %v112
    %v118 = vpop.permute.xlu0 %117
    %v119 = vperm.slane %v42, 6
    %v120 = vlaneseq
    %v121 = vshrl.u32 %v120, 7
    %123 = vset.pattern.permute.xlu0 %v121
    %124 = vperm.xlu0 %123, %v119
    %v125 = vpop.permute.xlu0 %124
    %v126 = vperm.slane %v42, 7
    %v127 = vlaneseq
    %v128 = vshrl.u32 %v127, 7
    %130 = vset.pattern.permute.xlu0 %v128
    %131 = vperm.xlu0 %130, %v126
    %v132 = vpop.permute.xlu0 %131
    %v134 = vperm.slane %v43, 0
    %v135 = vperm.slane %v43, 1
    %v136 = vperm.slane %v43, 2
    %v137 = vperm.slane %v43, 3
    %v142 = vmul.f32 %v83, %v134
    %v143 = vmul.f32 %v83, %v135
    %v144 = vmul.f32 %v83, %v136
    %v145 = vmul.f32 %v83, %v137
    %v146 = vmul.f32 %v90, %v134
    %v147 = vmul.f32 %v90, %v135
    %v148 = vmul.f32 %v90, %v136
    %v149 = vmul.f32 %v90, %v137
    %v150 = vmul.f32 %v97, %v134
    %v151 = vmul.f32 %v97, %v135
    %v152 = vmul.f32 %v97, %v136
    %v153 = vmul.f32 %v97, %v137
    %v154 = vmul.f32 %v104, %v134
    %v155 = vmul.f32 %v104, %v135
    %v156 = vmul.f32 %v104, %v136
    %v157 = vmul.f32 %v104, %v137
    %v158 = vmul.f32 %v111, %v134
    %v159 = vmul.f32 %v111, %v135
    %v160 = vmul.f32 %v111, %v136
    %v161 = vmul.f32 %v111, %v137
    %v162 = vmul.f32 %v118, %v134
    %v163 = vmul.f32 %v118, %v135
    %v164 = vmul.f32 %v118, %v136
    %v165 = vmul.f32 %v118, %v137
    %v166 = vmul.f32 %v125, %v134
    %v167 = vmul.f32 %v125, %v135
    %v168 = vmul.f32 %v125, %v136
    %v169 = vmul.f32 %v125, %v137
    %v170 = vmul.f32 %v132, %v134
    %v171 = vmul.f32 %v132, %v135
    %v172 = vmul.f32 %v132, %v136
    %v173 = vmul.f32 %v132, %v137
    %v175 = vperm.slane %v76, 0
    %v176 = vperm.slane %v76, 1
    %v177 = vperm.slane %v76, 2
    %v178 = vperm.slane %v76, 3
    %v183 = vadd.f32 %v142, %v175
    %v184 = vadd.f32 %v143, %v176
    %v185 = vadd.f32 %v144, %v177
    %v186 = vadd.f32 %v145, %v178
    %v187 = vadd.f32 %v146, %v175
    %v188 = vadd.f32 %v147, %v176
    %v189 = vadd.f32 %v148, %v177
    %v190 = vadd.f32 %v149, %v178
    %v191 = vadd.f32 %v150, %v175
    %v192 = vadd.f32 %v151, %v176
    %v193 = vadd.f32 %v152, %v177
    %v194 = vadd.f32 %v153, %v178
    %v195 = vadd.f32 %v154, %v175
    %v196 = vadd.f32 %v155, %v176
    %v197 = vadd.f32 %v156, %v177
    %v198 = vadd.f32 %v157, %v178
    %v199 = vadd.f32 %v158, %v175
    %v200 = vadd.f32 %v159, %v176
    %v201 = vadd.f32 %v160, %v177
    %v202 = vadd.f32 %v161, %v178
    %v203 = vadd.f32 %v162, %v175
    %v204 = vadd.f32 %v163, %v176
    %v205 = vadd.f32 %v164, %v177
    %v206 = vadd.f32 %v165, %v178
    %v207 = vadd.f32 %v166, %v175
    %v208 = vadd.f32 %v167, %v176
    %v209 = vadd.f32 %v168, %v177
    %v210 = vadd.f32 %v169, %v178
    %v211 = vadd.f32 %v170, %v175
    %v212 = vadd.f32 %v171, %v176
    %v213 = vadd.f32 %v172, %v177
    %v214 = vadd.f32 %v173, %v178
    %v247 = vunpack.c.l.b16 %v44
    %v248 = vunpack.c.h.b16 %v44
    %v249 = vunpack.c.l.b16 %v45
    %v250 = vunpack.c.h.b16 %v45
    %v251 = vunpack.c.l.b16 %v46
    %v252 = vunpack.c.h.b16 %v46
    %v253 = vunpack.c.l.b16 %v47
    %v254 = vunpack.c.h.b16 %v47
    %v255 = vunpack.c.l.b16 %v48
    %v256 = vunpack.c.h.b16 %v48
    %v257 = vunpack.c.l.b16 %v49
    %v258 = vunpack.c.h.b16 %v49
    %v259 = vunpack.c.l.b16 %v50
    %v260 = vunpack.c.h.b16 %v50
    %v261 = vunpack.c.l.b16 %v51
    %v262 = vunpack.c.h.b16 %v51
    %v263 = vunpack.c.l.b16 %v52
    %v264 = vunpack.c.h.b16 %v52
    %v265 = vunpack.c.l.b16 %v53
    %v266 = vunpack.c.h.b16 %v53
    %v267 = vunpack.c.l.b16 %v54
    %v268 = vunpack.c.h.b16 %v54
    %v269 = vunpack.c.l.b16 %v55
    %v270 = vunpack.c.h.b16 %v55
    %v271 = vunpack.c.l.b16 %v56
    %v272 = vunpack.c.h.b16 %v56
    %v273 = vunpack.c.l.b16 %v57
    %v274 = vunpack.c.h.b16 %v57
    %v275 = vunpack.c.l.b16 %v58
    %v276 = vunpack.c.h.b16 %v58
    %v277 = vunpack.c.l.b16 %v59
    %v278 = vunpack.c.h.b16 %v59
    %v279 = vunpack.c.l.b16 %v60
    %v280 = vunpack.c.h.b16 %v60
    %v281 = vunpack.c.l.b16 %v61
    %v282 = vunpack.c.h.b16 %v61
    %v283 = vunpack.c.l.b16 %v62
    %v284 = vunpack.c.h.b16 %v62
    %v285 = vunpack.c.l.b16 %v63
    %v286 = vunpack.c.h.b16 %v63
    %v287 = vunpack.c.l.b16 %v64
    %v288 = vunpack.c.h.b16 %v64
    %v289 = vunpack.c.l.b16 %v65
    %v290 = vunpack.c.h.b16 %v65
    %v291 = vunpack.c.l.b16 %v66
    %v292 = vunpack.c.h.b16 %v66
    %v293 = vunpack.c.l.b16 %v67
    %v294 = vunpack.c.h.b16 %v67
    %v295 = vunpack.c.l.b16 %v68
    %v296 = vunpack.c.h.b16 %v68
    %v297 = vunpack.c.l.b16 %v69
    %v298 = vunpack.c.h.b16 %v69
    %v299 = vunpack.c.l.b16 %v70
    %v300 = vunpack.c.h.b16 %v70
    %v301 = vunpack.c.l.b16 %v71
    %v302 = vunpack.c.h.b16 %v71
    %v303 = vunpack.c.l.b16 %v72
    %v304 = vunpack.c.h.b16 %v72
    %v305 = vunpack.c.l.b16 %v73
    %v306 = vunpack.c.h.b16 %v73
    %v307 = vunpack.c.l.b16 %v74
    %v308 = vunpack.c.h.b16 %v74
    %v309 = vunpack.c.l.b16 %v75
    %v310 = vunpack.c.h.b16 %v75
    %v311 = vpack.c.b16 %v251, %v247
    %v312 = vpack.c.b16 %v252, %v248
    %v313 = vpack.c.b16 %v253, %v249
    %v314 = vpack.c.b16 %v254, %v250
    %v315 = vpack.c.b16 %v259, %v255
    %v316 = vpack.c.b16 %v260, %v256
    %v317 = vpack.c.b16 %v261, %v257
    %v318 = vpack.c.b16 %v262, %v258
    %v319 = vpack.c.b16 %v267, %v263
    %v320 = vpack.c.b16 %v268, %v264
    %v321 = vpack.c.b16 %v269, %v265
    %v322 = vpack.c.b16 %v270, %v266
    %v323 = vpack.c.b16 %v275, %v271
    %v324 = vpack.c.b16 %v276, %v272
    %v325 = vpack.c.b16 %v277, %v273
    %v326 = vpack.c.b16 %v278, %v274
    %v327 = vpack.c.b16 %v283, %v279
    %v328 = vpack.c.b16 %v284, %v280
    %v329 = vpack.c.b16 %v285, %v281
    %v330 = vpack.c.b16 %v286, %v282
    %v331 = vpack.c.b16 %v291, %v287
    %v332 = vpack.c.b16 %v292, %v288
    %v333 = vpack.c.b16 %v293, %v289
    %v334 = vpack.c.b16 %v294, %v290
    %v335 = vpack.c.b16 %v299, %v295
    %v336 = vpack.c.b16 %v300, %v296
    %v337 = vpack.c.b16 %v301, %v297
    %v338 = vpack.c.b16 %v302, %v298
    %v339 = vpack.c.b16 %v307, %v303
    %v340 = vpack.c.b16 %v308, %v304
    %v341 = vpack.c.b16 %v309, %v305
    %v342 = vpack.c.b16 %v310, %v306
    %375 = vmatpush.bf16.msra.mxu0 %v339
    %376 = vmatpush.bf16.msra.mxu0 %v335
    %377 = vmatpush.bf16.msra.mxu0 %v331
    %378 = vmatpush.bf16.msra.mxu0 %v327
    %379 = vmatpush.bf16.msra.mxu0 %v323
    %380 = vmatpush.bf16.msra.mxu0 %v319
    %381 = vmatpush.bf16.msra.mxu0 %v315
    %382 = vmatpush.bf16.msra.mxu0 %v311
    %383 = vmatmul.bf16.gmra.mxu0 0
    %v384 = vpop.f32.mrf.mxu0
    %v385 = vadd.f32 0.0, %v384
    %v386 = vpop.f32.mrf.mxu0
    %387 = vdwg.mxu0
    %388 = vmatpush.bf16.msra.mxu0 %v340
    %389 = vmatpush.bf16.msra.mxu0 %v336
    %390 = vmatpush.bf16.msra.mxu0 %v332
    %391 = vmatpush.bf16.msra.mxu0 %v328
    %392 = vmatpush.bf16.msra.mxu0 %v324
    %393 = vmatpush.bf16.msra.mxu0 %v320
    %394 = vmatpush.bf16.msra.mxu0 %v316
    %395 = vmatpush.bf16.msra.mxu0 %v312
    %396 = vmatmul.bf16.gmra.mxu0 0
    %v397 = vpop.f32.mrf.mxu0
    %v398 = vadd.f32 0.0, %v397
    %v399 = vpop.f32.mrf.mxu0
    %400 = vdwg.mxu0
    %401 = vmatpush.bf16.msra.mxu0 %v341
    %402 = vmatpush.bf16.msra.mxu0 %v337
    %403 = vmatpush.bf16.msra.mxu0 %v333
    %404 = vmatpush.bf16.msra.mxu0 %v329
    %405 = vmatpush.bf16.msra.mxu0 %v325
    %406 = vmatpush.bf16.msra.mxu0 %v321
    %407 = vmatpush.bf16.msra.mxu0 %v317
    %408 = vmatpush.bf16.msra.mxu0 %v313
    %409 = vmatmul.bf16.gmra.mxu0 0
    %v410 = vpop.f32.mrf.mxu0
    %v411 = vadd.f32 0.0, %v410
    %v412 = vpop.f32.mrf.mxu0
    %413 = vdwg.mxu0
    %414 = vmatpush.bf16.msra.mxu0 %v342
    %415 = vmatpush.bf16.msra.mxu0 %v338
    %416 = vmatpush.bf16.msra.mxu0 %v334
    %417 = vmatpush.bf16.msra.mxu0 %v330
    %418 = vmatpush.bf16.msra.mxu0 %v326
    %419 = vmatpush.bf16.msra.mxu0 %v322
    %420 = vmatpush.bf16.msra.mxu0 %v318
    %421 = vmatpush.bf16.msra.mxu0 %v314
    %422 = vmatmul.bf16.gmra.mxu0 0
    %v423 = vpop.f32.mrf.mxu0
    %v424 = vadd.f32 0.0, %v423
    %v425 = vpop.f32.mrf.mxu0
    %426 = vdwg.mxu0
    %v427 = vadd.f32 %v183, %v385
    %v428 = vadd.f32 %v184, %v398
    %v429 = vadd.f32 %v185, %v411
    %v430 = vadd.f32 %v186, %v424
    %v431 = vxor.u32 %v427, 2147483648
    %v432 = vxor.u32 %v428, 2147483648
    %v433 = vxor.u32 %v429, 2147483648
    %v434 = vmul.f32 %v431, 1.442695
    %v435 = vpow.pop %v434
    %v436 = vmul.f32 %v432, 1.442695
    %v437 = vpow.pop %v436
    %v438 = vmul.f32 %v433, 1.442695
    %v439 = vpow.pop %v438
    %v440 = vadd.f32 %v435, 1.0
    %v441 = vadd.f32 %v437, 1.0
    %v442 = vadd.f32 %v439, 1.0
    %v443 = vrcp.pop %v440
    %v444 = vmul.f32 %v440, %v443
    %v445 = vsub.f32 1.0, %v444
    %v446 = vmul.f32 %v443, %v445
    %v447 = vadd.f32 %v443, %v446
    %vm448 = vweird.f32 %v440
    %vm449 = vweird.f32 %v443
    %vm450 = vmor %vm448, %vm449
    %v451 = vsel %vm450, %v443, %v447
    %v452 = vand.u32 2147483647, %v440
    %vm453 = vcmp.eq.f32.partialorder %v452, 8.507059e+37
    %v454 = vand.u32 %v440, 2147483648
    %v455 = vor.u32 1.1754944e-38, %v454
    %v456 = vsel %vm453, %v455, %v451
    %v457 = vmul.f32 1.0, %v456
    %v458 = vrcp.pop %v441
    %v459 = vmul.f32 %v441, %v458
    %v460 = vsub.f32 1.0, %v459
    %v461 = vmul.f32 %v458, %v460
    %v462 = vadd.f32 %v458, %v461
    %vm463 = vweird.f32 %v441
    %vm464 = vweird.f32 %v458
    %vm465 = vmor %vm463, %vm464
    %v466 = vsel %vm465, %v458, %v462
    %v467 = vand.u32 2147483647, %v441
    %vm468 = vcmp.eq.f32.partialorder %v467, 8.507059e+37
    %v469 = vand.u32 %v441, 2147483648
    %v470 = vor.u32 1.1754944e-38, %v469
    %v471 = vsel %vm468, %v470, %v466
    %v472 = vmul.f32 1.0, %v471
    %v473 = vrcp.pop %v442
    %v474 = vmul.f32 %v442, %v473
    %v475 = vsub.f32 1.0, %v474
    %v476 = vmul.f32 %v473, %v475
    %v477 = vadd.f32 %v473, %v476
    %vm478 = vweird.f32 %v442
    %vm479 = vweird.f32 %v473
    %vm480 = vmor %vm478, %vm479
    %v481 = vsel %vm480, %v473, %v477
    %v482 = vand.u32 2147483647, %v442
    %vm483 = vcmp.eq.f32.partialorder %v482, 8.507059e+37
    %v484 = vand.u32 %v442, 2147483648
    %v485 = vor.u32 1.1754944e-38, %v484
    %v486 = vsel %vm483, %v485, %v481
    %v487 = vmul.f32 1.0, %v486
    %v488 = vtanh.pop %v430
    %v489 = vmul.f32 %v472, 0.0
    %v490 = vmul.f32 %v457, %v488
    %v491 = vadd.f32 %v489, %v490
    %v492 = vtanh.pop %v491
    %v493 = vmul.f32 %v487, %v492
    %v494 = vpack.c.bf16 %v493, %v493
    %495 = vmatpush.bf16.msra.mxu0 %v339
    %496 = vmatpush.bf16.msra.mxu0 %v335
    %497 = vmatpush.bf16.msra.mxu0 %v331
    %498 = vmatpush.bf16.msra.mxu0 %v327
    %499 = vmatpush.bf16.msra.mxu0 %v323
    %500 = vmatpush.bf16.msra.mxu0 %v319
    %501 = vmatpush.bf16.msra.mxu0 %v315
    %502 = vmatpush.bf16.msra.mxu0 %v311
    %503 = vmatmul.bf16.gmra.mxu0 %v494
    %v504 = vpop.f32.mrf.mxu0
    %v505 = vadd.f32 0.0, %v504
    %v506 = vpop.f32.mrf.mxu0
    %507 = vdwg.mxu0
    %508 = vmatpush.bf16.msra.mxu0 %v340
    %509 = vmatpush.bf16.msra.mxu0 %v336
    %510 = vmatpush.bf16.msra.mxu0 %v332
    %511 = vmatpush.bf16.msra.mxu0 %v328
    %512 = vmatpush.bf16.msra.mxu0 %v324
    %513 = vmatpush.bf16.msra.mxu0 %v320
    %514 = vmatpush.bf16.msra.mxu0 %v316
    %515 = vmatpush.bf16.msra.mxu0 %v312
    %516 = vmatmul.bf16.gmra.mxu0 %v494
    %v517 = vpop.f32.mrf.mxu0
    %v518 = vadd.f32 0.0, %v517
    %v519 = vpop.f32.mrf.mxu0
    %520 = vdwg.mxu0
    %521 = vmatpush.bf16.msra.mxu0 %v341
    %522 = vmatpush.bf16.msra.mxu0 %v337
    %523 = vmatpush.bf16.msra.mxu0 %v333
    %524 = vmatpush.bf16.msra.mxu0 %v329
    %525 = vmatpush.bf16.msra.mxu0 %v325
    %526 = vmatpush.bf16.msra.mxu0 %v321
    %527 = vmatpush.bf16.msra.mxu0 %v317
    %528 = vmatpush.bf16.msra.mxu0 %v313
    %529 = vmatmul.bf16.gmra.mxu0 %v494
    %v530 = vpop.f32.mrf.mxu0
    %v531 = vadd.f32 0.0, %v530
    %v532 = vpop.f32.mrf.mxu0
    %533 = vdwg.mxu0
    %534 = vmatpush.bf16.msra.mxu0 %v342
    %535 = vmatpush.bf16.msra.mxu0 %v338
    %536 = vmatpush.bf16.msra.mxu0 %v334
    %537 = vmatpush.bf16.msra.mxu0 %v330
    %538 = vmatpush.bf16.msra.mxu0 %v326
    %539 = vmatpush.bf16.msra.mxu0 %v322
    %540 = vmatpush.bf16.msra.mxu0 %v318
    %541 = vmatpush.bf16.msra.mxu0 %v314
    %542 = vmatmul.bf16.gmra.mxu0 %v494
    %v543 = vpop.f32.mrf.mxu0
    %v544 = vadd.f32 0.0, %v543
    %v545 = vpop.f32.mrf.mxu0
    %546 = vdwg.mxu0
    %v547 = vadd.f32 %v187, %v505
    %v548 = vadd.f32 %v188, %v518
    %v549 = vadd.f32 %v189, %v531
    %v550 = vadd.f32 %v190, %v544
    %v551 = vxor.u32 %v547, 2147483648
    %v552 = vxor.u32 %v548, 2147483648
    %v553 = vxor.u32 %v549, 2147483648
    %v554 = vmul.f32 %v551, 1.442695
    %v555 = vpow.pop %v554
    %v556 = vmul.f32 %v552, 1.442695
    %v557 = vpow.pop %v556
    %v558 = vmul.f32 %v553, 1.442695
    %v559 = vpow.pop %v558
    %v560 = vadd.f32 %v555, 1.0
    %v561 = vadd.f32 %v557, 1.0
    %v562 = vadd.f32 %v559, 1.0
    %v563 = vrcp.pop %v560
    %v564 = vmul.f32 %v560, %v563
    %v565 = vsub.f32 1.0, %v564
    %v566 = vmul.f32 %v563, %v565
    %v567 = vadd.f32 %v563, %v566
    %vm568 = vweird.f32 %v560
    %vm569 = vweird.f32 %v563
    %vm570 = vmor %vm568, %vm569
    %v571 = vsel %vm570, %v563, %v567
    %v572 = vand.u32 2147483647, %v560
    %vm573 = vcmp.eq.f32.partialorder %v572, 8.507059e+37
    %v574 = vand.u32 %v560, 2147483648
    %v575 = vor.u32 1.1754944e-38, %v574
    %v576 = vsel %vm573, %v575, %v571
    %v577 = vmul.f32 1.0, %v576
    %v578 = vrcp.pop %v561
    %v579 = vmul.f32 %v561, %v578
    %v580 = vsub.f32 1.0, %v579
    %v581 = vmul.f32 %v578, %v580
    %v582 = vadd.f32 %v578, %v581
    %vm583 = vweird.f32 %v561
    %vm584 = vweird.f32 %v578
    %vm585 = vmor %vm583, %vm584
    %v586 = vsel %vm585, %v578, %v582
    %v587 = vand.u32 2147483647, %v561
    %vm588 = vcmp.eq.f32.partialorder %v587, 8.507059e+37
    %v589 = vand.u32 %v561, 2147483648
    %v590 = vor.u32 1.1754944e-38, %v589
    %v591 = vsel %vm588, %v590, %v586
    %v592 = vmul.f32 1.0, %v591
    %v593 = vrcp.pop %v562
    %v594 = vmul.f32 %v562, %v593
    %v595 = vsub.f32 1.0, %v594
    %v596 = vmul.f32 %v593, %v595
    %v597 = vadd.f32 %v593, %v596
    %vm598 = vweird.f32 %v562
    %vm599 = vweird.f32 %v593
    %vm600 = vmor %vm598, %vm599
    %v601 = vsel %vm600, %v593, %v597
    %v602 = vand.u32 2147483647, %v562
    %vm603 = vcmp.eq.f32.partialorder %v602, 8.507059e+37
    %v604 = vand.u32 %v562, 2147483648
    %v605 = vor.u32 1.1754944e-38, %v604
    %v606 = vsel %vm603, %v605, %v601
    %v607 = vmul.f32 1.0, %v606
    %v608 = vtanh.pop %v550
    %v609 = vmul.f32 %v592, %v491
    %v610 = vmul.f32 %v577, %v608
    %v611 = vadd.f32 %v609, %v610
    %v612 = vtanh.pop %v611
    %v613 = vmul.f32 %v607, %v612
    %v614 = vpack.c.bf16 %v613, %v613
    %615 = vmatpush.bf16.msra.mxu0 %v339
    %616 = vmatpush.bf16.msra.mxu0 %v335
    %617 = vmatpush.bf16.msra.mxu0 %v331
    %618 = vmatpush.bf16.msra.mxu0 %v327
    %619 = vmatpush.bf16.msra.mxu0 %v323
    %620 = vmatpush.bf16.msra.mxu0 %v319
    %621 = vmatpush.bf16.msra.mxu0 %v315
    %622 = vmatpush.bf16.msra.mxu0 %v311
    %623 = vmatmul.bf16.gmra.mxu0 %v614
    %v624 = vpop.f32.mrf.mxu0
    %v625 = vadd.f32 0.0, %v624
    %v626 = vpop.f32.mrf.mxu0
    %627 = vdwg.mxu0
    %628 = vmatpush.bf16.msra.mxu0 %v340
    %629 = vmatpush.bf16.msra.mxu0 %v336
    %630 = vmatpush.bf16.msra.mxu0 %v332
    %631 = vmatpush.bf16.msra.mxu0 %v328
    %632 = vmatpush.bf16.msra.mxu0 %v324
    %633 = vmatpush.bf16.msra.mxu0 %v320
    %634 = vmatpush.bf16.msra.mxu0 %v316
    %635 = vmatpush.bf16.msra.mxu0 %v312
    %636 = vmatmul.bf16.gmra.mxu0 %v614
    %v637 = vpop.f32.mrf.mxu0
    %v638 = vadd.f32 0.0, %v637
    %v639 = vpop.f32.mrf.mxu0
    %640 = vdwg.mxu0
    %641 = vmatpush.bf16.msra.mxu0 %v341
    %642 = vmatpush.bf16.msra.mxu0 %v337
    %643 = vmatpush.bf16.msra.mxu0 %v333
    %644 = vmatpush.bf16.msra.mxu0 %v329
    %645 = vmatpush.bf16.msra.mxu0 %v325
    %646 = vmatpush.bf16.msra.mxu0 %v321
    %647 = vmatpush.bf16.msra.mxu0 %v317
    %648 = vmatpush.bf16.msra.mxu0 %v313
    %649 = vmatmul.bf16.gmra.mxu0 %v614
    %v650 = vpop.f32.mrf.mxu0
    %v651 = vadd.f32 0.0, %v650
    %v652 = vpop.f32.mrf.mxu0
    %653 = vdwg.mxu0
    %654 = vmatpush.bf16.msra.mxu0 %v342
    %655 = vmatpush.bf16.msra.mxu0 %v338
    %656 = vmatpush.bf16.msra.mxu0 %v334
    %657 = vmatpush.bf16.msra.mxu0 %v330
    %658 = vmatpush.bf16.msra.mxu0 %v326
    %659 = vmatpush.bf16.msra.mxu0 %v322
    %660 = vmatpush.bf16.msra.mxu0 %v318
    %661 = vmatpush.bf16.msra.mxu0 %v314
    %662 = vmatmul.bf16.gmra.mxu0 %v614
    %v663 = vpop.f32.mrf.mxu0
    %v664 = vadd.f32 0.0, %v663
    %v665 = vpop.f32.mrf.mxu0
    %666 = vdwg.mxu0
    %v667 = vadd.f32 %v191, %v625
    %v668 = vadd.f32 %v192, %v638
    %v669 = vadd.f32 %v193, %v651
    %v670 = vadd.f32 %v194, %v664
    %v671 = vxor.u32 %v667, 2147483648
    %v672 = vxor.u32 %v668, 2147483648
    %v673 = vxor.u32 %v669, 2147483648
    %v674 = vmul.f32 %v671, 1.442695
    %v675 = vpow.pop %v674
    %v676 = vmul.f32 %v672, 1.442695
    %v677 = vpow.pop %v676
    %v678 = vmul.f32 %v673, 1.442695
    %v679 = vpow.pop %v678
    %v680 = vadd.f32 %v675, 1.0
    %v681 = vadd.f32 %v677, 1.0
    %v682 = vadd.f32 %v679, 1.0
    %v683 = vrcp.pop %v680
    %v684 = vmul.f32 %v680, %v683
    %v685 = vsub.f32 1.0, %v684
    %v686 = vmul.f32 %v683, %v685
    %v687 = vadd.f32 %v683, %v686
    %vm688 = vweird.f32 %v680
    %vm689 = vweird.f32 %v683
    %vm690 = vmor %vm688, %vm689
    %v691 = vsel %vm690, %v683, %v687
    %v692 = vand.u32 2147483647, %v680
    %vm693 = vcmp.eq.f32.partialorder %v692, 8.507059e+37
    %v694 = vand.u32 %v680, 2147483648
    %v695 = vor.u32 1.1754944e-38, %v694
    %v696 = vsel %vm693, %v695, %v691
    %v697 = vmul.f32 1.0, %v696
    %v698 = vrcp.pop %v681
    %v699 = vmul.f32 %v681, %v698
    %v700 = vsub.f32 1.0, %v699
    %v701 = vmul.f32 %v698, %v700
    %v702 = vadd.f32 %v698, %v701
    %vm703 = vweird.f32 %v681
    %vm704 = vweird.f32 %v698
    %vm705 = vmor %vm703, %vm704
    %v706 = vsel %vm705, %v698, %v702
    %v707 = vand.u32 2147483647, %v681
    %vm708 = vcmp.eq.f32.partialorder %v707, 8.507059e+37
    %v709 = vand.u32 %v681, 2147483648
    %v710 = vor.u32 1.1754944e-38, %v709
    %v711 = vsel %vm708, %v710, %v706
    %v712 = vmul.f32 1.0, %v711
    %v713 = vrcp.pop %v682
    %v714 = vmul.f32 %v682, %v713
    %v715 = vsub.f32 1.0, %v714
    %v716 = vmul.f32 %v713, %v715
    %v717 = vadd.f32 %v713, %v716
    %vm718 = vweird.f32 %v682
    %vm719 = vweird.f32 %v713
    %vm720 = vmor %vm718, %vm719
    %v721 = vsel %vm720, %v713, %v717
    %v722 = vand.u32 2147483647, %v682
    %vm723 = vcmp.eq.f32.partialorder %v722, 8.507059e+37
    %v724 = vand.u32 %v682, 2147483648
    %v725 = vor.u32 1.1754944e-38, %v724
    %v726 = vsel %vm723, %v725, %v721
    %v727 = vmul.f32 1.0, %v726
    %v728 = vtanh.pop %v670
    %v729 = vmul.f32 %v712, %v611
    %v730 = vmul.f32 %v697, %v728
    %v731 = vadd.f32 %v729, %v730
    %v732 = vtanh.pop %v731
    %v733 = vmul.f32 %v727, %v732
    %v734 = vpack.c.bf16 %v733, %v733
    %735 = vmatpush.bf16.msra.mxu0 %v339
    %736 = vmatpush.bf16.msra.mxu0 %v335
    %737 = vmatpush.bf16.msra.mxu0 %v331
    %738 = vmatpush.bf16.msra.mxu0 %v327
    %739 = vmatpush.bf16.msra.mxu0 %v323
    %740 = vmatpush.bf16.msra.mxu0 %v319
    %741 = vmatpush.bf16.msra.mxu0 %v315
    %742 = vmatpush.bf16.msra.mxu0 %v311
    %743 = vmatmul.bf16.gmra.mxu0 %v734
    %v744 = vpop.f32.mrf.mxu0
    %v745 = vadd.f32 0.0, %v744
    %v746 = vpop.f32.mrf.mxu0
    %747 = vdwg.mxu0
    %748 = vmatpush.bf16.msra.mxu0 %v340
    %749 = vmatpush.bf16.msra.mxu0 %v336
    %750 = vmatpush.bf16.msra.mxu0 %v332
    %751 = vmatpush.bf16.msra.mxu0 %v328
    %752 = vmatpush.bf16.msra.mxu0 %v324
    %753 = vmatpush.bf16.msra.mxu0 %v320
    %754 = vmatpush.bf16.msra.mxu0 %v316
    %755 = vmatpush.bf16.msra.mxu0 %v312
    %756 = vmatmul.bf16.gmra.mxu0 %v734
    %v757 = vpop.f32.mrf.mxu0
    %v758 = vadd.f32 0.0, %v757
    %v759 = vpop.f32.mrf.mxu0
    %760 = vdwg.mxu0
    %761 = vmatpush.bf16.msra.mxu0 %v341
    %762 = vmatpush.bf16.msra.mxu0 %v337
    %763 = vmatpush.bf16.msra.mxu0 %v333
    %764 = vmatpush.bf16.msra.mxu0 %v329
    %765 = vmatpush.bf16.msra.mxu0 %v325
    %766 = vmatpush.bf16.msra.mxu0 %v321
    %767 = vmatpush.bf16.msra.mxu0 %v317
    %768 = vmatpush.bf16.msra.mxu0 %v313
    %769 = vmatmul.bf16.gmra.mxu0 %v734
    %v770 = vpop.f32.mrf.mxu0
    %v771 = vadd.f32 0.0, %v770
    %v772 = vpop.f32.mrf.mxu0
    %773 = vdwg.mxu0
    %774 = vmatpush.bf16.msra.mxu0 %v342
    %775 = vmatpush.bf16.msra.mxu0 %v338
    %776 = vmatpush.bf16.msra.mxu0 %v334
    %777 = vmatpush.bf16.msra.mxu0 %v330
    %778 = vmatpush.bf16.msra.mxu0 %v326
    %779 = vmatpush.bf16.msra.mxu0 %v322
    %780 = vmatpush.bf16.msra.mxu0 %v318
    %781 = vmatpush.bf16.msra.mxu0 %v314
    %782 = vmatmul.bf16.gmra.mxu0 %v734
    %v783 = vpop.f32.mrf.mxu0
    %v784 = vadd.f32 0.0, %v783
    %v785 = vpop.f32.mrf.mxu0
    %786 = vdwg.mxu0
    %v787 = vadd.f32 %v195, %v745
    %v788 = vadd.f32 %v196, %v758
    %v789 = vadd.f32 %v197, %v771
    %v790 = vadd.f32 %v198, %v784
    %v791 = vxor.u32 %v787, 2147483648
    %v792 = vxor.u32 %v788, 2147483648
    %v793 = vxor.u32 %v789, 2147483648
    %v794 = vmul.f32 %v791, 1.442695
    %v795 = vpow.pop %v794
    %v796 = vmul.f32 %v792, 1.442695
    %v797 = vpow.pop %v796
    %v798 = vmul.f32 %v793, 1.442695
    %v799 = vpow.pop %v798
    %v800 = vadd.f32 %v795, 1.0
    %v801 = vadd.f32 %v797, 1.0
    %v802 = vadd.f32 %v799, 1.0
    %v803 = vrcp.pop %v800
    %v804 = vmul.f32 %v800, %v803
    %v805 = vsub.f32 1.0, %v804
    %v806 = vmul.f32 %v803, %v805
    %v807 = vadd.f32 %v803, %v806
    %vm808 = vweird.f32 %v800
    %vm809 = vweird.f32 %v803
    %vm810 = vmor %vm808, %vm809
    %v811 = vsel %vm810, %v803, %v807
    %v812 = vand.u32 2147483647, %v800
    %vm813 = vcmp.eq.f32.partialorder %v812, 8.507059e+37
    %v814 = vand.u32 %v800, 2147483648
    %v815 = vor.u32 1.1754944e-38, %v814
    %v816 = vsel %vm813, %v815, %v811
    %v817 = vmul.f32 1.0, %v816
    %v818 = vrcp.pop %v801
    %v819 = vmul.f32 %v801, %v818
    %v820 = vsub.f32 1.0, %v819
    %v821 = vmul.f32 %v818, %v820
    %v822 = vadd.f32 %v818, %v821
    %vm823 = vweird.f32 %v801
    %vm824 = vweird.f32 %v818
    %vm825 = vmor %vm823, %vm824
    %v826 = vsel %vm825, %v818, %v822
    %v827 = vand.u32 2147483647, %v801
    %vm828 = vcmp.eq.f32.partialorder %v827, 8.507059e+37
    %v829 = vand.u32 %v801, 2147483648
    %v830 = vor.u32 1.1754944e-38, %v829
    %v831 = vsel %vm828, %v830, %v826
    %v832 = vmul.f32 1.0, %v831
    %v833 = vrcp.pop %v802
    %v834 = vmul.f32 %v802, %v833
    %v835 = vsub.f32 1.0, %v834
    %v836 = vmul.f32 %v833, %v835
    %v837 = vadd.f32 %v833, %v836
    %vm838 = vweird.f32 %v802
    %vm839 = vweird.f32 %v833
    %vm840 = vmor %vm838, %vm839
    %v841 = vsel %vm840, %v833, %v837
    %v842 = vand.u32 2147483647, %v802
    %vm843 = vcmp.eq.f32.partialorder %v842, 8.507059e+37
    %v844 = vand.u32 %v802, 2147483648
    %v845 = vor.u32 1.1754944e-38, %v844
    %v846 = vsel %vm843, %v845, %v841
    %v847 = vmul.f32 1.0, %v846
    %v848 = vtanh.pop %v790
    %v849 = vmul.f32 %v832, %v731
    %v850 = vmul.f32 %v817, %v848
    %v851 = vadd.f32 %v849, %v850
    %v852 = vtanh.pop %v851
    %v853 = vmul.f32 %v847, %v852
    %v854 = vpack.c.bf16 %v853, %v853
    %855 = vmatpush.bf16.msra.mxu0 %v339
    %856 = vmatpush.bf16.msra.mxu0 %v335
    %857 = vmatpush.bf16.msra.mxu0 %v331
    %858 = vmatpush.bf16.msra.mxu0 %v327
    %859 = vmatpush.bf16.msra.mxu0 %v323
    %860 = vmatpush.bf16.msra.mxu0 %v319
    %861 = vmatpush.bf16.msra.mxu0 %v315
    %862 = vmatpush.bf16.msra.mxu0 %v311
    %863 = vmatmul.bf16.gmra.mxu0 %v854
    %v864 = vpop.f32.mrf.mxu0
    %v865 = vadd.f32 0.0, %v864
    %v866 = vpop.f32.mrf.mxu0
    %867 = vdwg.mxu0
    %868 = vmatpush.bf16.msra.mxu0 %v340
    %869 = vmatpush.bf16.msra.mxu0 %v336
    %870 = vmatpush.bf16.msra.mxu0 %v332
    %871 = vmatpush.bf16.msra.mxu0 %v328
    %872 = vmatpush.bf16.msra.mxu0 %v324
    %873 = vmatpush.bf16.msra.mxu0 %v320
    %874 = vmatpush.bf16.msra.mxu0 %v316
    %875 = vmatpush.bf16.msra.mxu0 %v312
    %876 = vmatmul.bf16.gmra.mxu0 %v854
    %v877 = vpop.f32.mrf.mxu0
    %v878 = vadd.f32 0.0, %v877
    %v879 = vpop.f32.mrf.mxu0
    %880 = vdwg.mxu0
    %881 = vmatpush.bf16.msra.mxu0 %v341
    %882 = vmatpush.bf16.msra.mxu0 %v337
    %883 = vmatpush.bf16.msra.mxu0 %v333
    %884 = vmatpush.bf16.msra.mxu0 %v329
    %885 = vmatpush.bf16.msra.mxu0 %v325
    %886 = vmatpush.bf16.msra.mxu0 %v321
    %887 = vmatpush.bf16.msra.mxu0 %v317
    %888 = vmatpush.bf16.msra.mxu0 %v313
    %889 = vmatmul.bf16.gmra.mxu0 %v854
    %v890 = vpop.f32.mrf.mxu0
    %v891 = vadd.f32 0.0, %v890
    %v892 = vpop.f32.mrf.mxu0
    %893 = vdwg.mxu0
    %894 = vmatpush.bf16.msra.mxu0 %v342
    %895 = vmatpush.bf16.msra.mxu0 %v338
    %896 = vmatpush.bf16.msra.mxu0 %v334
    %897 = vmatpush.bf16.msra.mxu0 %v330
    %898 = vmatpush.bf16.msra.mxu0 %v326
    %899 = vmatpush.bf16.msra.mxu0 %v322
    %900 = vmatpush.bf16.msra.mxu0 %v318
    %901 = vmatpush.bf16.msra.mxu0 %v314
    %902 = vmatmul.bf16.gmra.mxu0 %v854
    %v903 = vpop.f32.mrf.mxu0
    %v904 = vadd.f32 0.0, %v903
    %v905 = vpop.f32.mrf.mxu0
    %906 = vdwg.mxu0
    %v907 = vadd.f32 %v199, %v865
    %v908 = vadd.f32 %v200, %v878
    %v909 = vadd.f32 %v201, %v891
    %v910 = vadd.f32 %v202, %v904
    %v911 = vxor.u32 %v907, 2147483648
    %v912 = vxor.u32 %v908, 2147483648
    %v913 = vxor.u32 %v909, 2147483648
    %v914 = vmul.f32 %v911, 1.442695
    %v915 = vpow.pop %v914
    %v916 = vmul.f32 %v912, 1.442695
    %v917 = vpow.pop %v916
    %v918 = vmul.f32 %v913, 1.442695
    %v919 = vpow.pop %v918
    %v920 = vadd.f32 %v915, 1.0
    %v921 = vadd.f32 %v917, 1.0
    %v922 = vadd.f32 %v919, 1.0
    %v923 = vrcp.pop %v920
    %v924 = vmul.f32 %v920, %v923
    %v925 = vsub.f32 1.0, %v924
    %v926 = vmul.f32 %v923, %v925
    %v927 = vadd.f32 %v923, %v926
    %vm928 = vweird.f32 %v920
    %vm929 = vweird.f32 %v923
    %vm930 = vmor %vm928, %vm929
    %v931 = vsel %vm930, %v923, %v927
    %v932 = vand.u32 2147483647, %v920
    %vm933 = vcmp.eq.f32.partialorder %v932, 8.507059e+37
    %v934 = vand.u32 %v920, 2147483648
    %v935 = vor.u32 1.1754944e-38, %v934
    %v936 = vsel %vm933, %v935, %v931
    %v937 = vmul.f32 1.0, %v936
    %v938 = vrcp.pop %v921
    %v939 = vmul.f32 %v921, %v938
    %v940 = vsub.f32 1.0, %v939
    %v941 = vmul.f32 %v938, %v940
    %v942 = vadd.f32 %v938, %v941
    %vm943 = vweird.f32 %v921
    %vm944 = vweird.f32 %v938
    %vm945 = vmor %vm943, %vm944
    %v946 = vsel %vm945, %v938, %v942
    %v947 = vand.u32 2147483647, %v921
    %vm948 = vcmp.eq.f32.partialorder %v947, 8.507059e+37
    %v949 = vand.u32 %v921, 2147483648
    %v950 = vor.u32 1.1754944e-38, %v949
    %v951 = vsel %vm948, %v950, %v946
    %v952 = vmul.f32 1.0, %v951
    %v953 = vrcp.pop %v922
    %v954 = vmul.f32 %v922, %v953
    %v955 = vsub.f32 1.0, %v954
    %v956 = vmul.f32 %v953, %v955
    %v957 = vadd.f32 %v953, %v956
    %vm958 = vweird.f32 %v922
    %vm959 = vweird.f32 %v953
    %vm960 = vmor %vm958, %vm959
    %v961 = vsel %vm960, %v953, %v957
    %v962 = vand.u32 2147483647, %v922
    %vm963 = vcmp.eq.f32.partialorder %v962, 8.507059e+37
    %v964 = vand.u32 %v922, 2147483648
    %v965 = vor.u32 1.1754944e-38, %v964
    %v966 = vsel %vm963, %v965, %v961
    %v967 = vmul.f32 1.0, %v966
    %v968 = vtanh.pop %v910
    %v969 = vmul.f32 %v952, %v851
    %v970 = vmul.f32 %v937, %v968
    %v971 = vadd.f32 %v969, %v970
    %v972 = vtanh.pop %v971
    %v973 = vmul.f32 %v967, %v972
    %v974 = vpack.c.bf16 %v973, %v973
    %975 = vmatpush.bf16.msra.mxu0 %v339
    %976 = vmatpush.bf16.msra.mxu0 %v335
    %977 = vmatpush.bf16.msra.mxu0 %v331
    %978 = vmatpush.bf16.msra.mxu0 %v327
    %979 = vmatpush.bf16.msra.mxu0 %v323
    %980 = vmatpush.bf16.msra.mxu0 %v319
    %981 = vmatpush.bf16.msra.mxu0 %v315
    %982 = vmatpush.bf16.msra.mxu0 %v311
    %983 = vmatmul.bf16.gmra.mxu0 %v974
    %v984 = vpop.f32.mrf.mxu0
    %v985 = vadd.f32 0.0, %v984
    %v986 = vpop.f32.mrf.mxu0
    %987 = vdwg.mxu0
    %988 = vmatpush.bf16.msra.mxu0 %v340
    %989 = vmatpush.bf16.msra.mxu0 %v336
    %990 = vmatpush.bf16.msra.mxu0 %v332
    %991 = vmatpush.bf16.msra.mxu0 %v328
    %992 = vmatpush.bf16.msra.mxu0 %v324
    %993 = vmatpush.bf16.msra.mxu0 %v320
    %994 = vmatpush.bf16.msra.mxu0 %v316
    %995 = vmatpush.bf16.msra.mxu0 %v312
    %996 = vmatmul.bf16.gmra.mxu0 %v974
    %v997 = vpop.f32.mrf.mxu0
    %v998 = vadd.f32 0.0, %v997
    %v999 = vpop.f32.mrf.mxu0
    %1000 = vdwg.mxu0
    %1001 = vmatpush.bf16.msra.mxu0 %v341
    %1002 = vmatpush.bf16.msra.mxu0 %v337
    %1003 = vmatpush.bf16.msra.mxu0 %v333
    %1004 = vmatpush.bf16.msra.mxu0 %v329
    %1005 = vmatpush.bf16.msra.mxu0 %v325
    %1006 = vmatpush.bf16.msra.mxu0 %v321
    %1007 = vmatpush.bf16.msra.mxu0 %v317
    %1008 = vmatpush.bf16.msra.mxu0 %v313
    %1009 = vmatmul.bf16.gmra.mxu0 %v974
    %v1010 = vpop.f32.mrf.mxu0
    %v1011 = vadd.f32 0.0, %v1010
    %v1012 = vpop.f32.mrf.mxu0
    %1013 = vdwg.mxu0
    %1014 = vmatpush.bf16.msra.mxu0 %v342
    %1015 = vmatpush.bf16.msra.mxu0 %v338
    %1016 = vmatpush.bf16.msra.mxu0 %v334
    %1017 = vmatpush.bf16.msra.mxu0 %v330
    %1018 = vmatpush.bf16.msra.mxu0 %v326
    %1019 = vmatpush.bf16.msra.mxu0 %v322
    %1020 = vmatpush.bf16.msra.mxu0 %v318
    %1021 = vmatpush.bf16.msra.mxu0 %v314
    %1022 = vmatmul.bf16.gmra.mxu0 %v974
    %v1023 = vpop.f32.mrf.mxu0
    %v1024 = vadd.f32 0.0, %v1023
    %v1025 = vpop.f32.mrf.mxu0
    %1026 = vdwg.mxu0
    %v1027 = vadd.f32 %v203, %v985
    %v1028 = vadd.f32 %v204, %v998
    %v1029 = vadd.f32 %v205, %v1011
    %v1030 = vadd.f32 %v206, %v1024
    %v1031 = vxor.u32 %v1027, 2147483648
    %v1032 = vxor.u32 %v1028, 2147483648
    %v1033 = vxor.u32 %v1029, 2147483648
    %v1034 = vmul.f32 %v1031, 1.442695
    %v1035 = vpow.pop %v1034
    %v1036 = vmul.f32 %v1032, 1.442695
    %v1037 = vpow.pop %v1036
    %v1038 = vmul.f32 %v1033, 1.442695
    %v1039 = vpow.pop %v1038
    %v1040 = vadd.f32 %v1035, 1.0
    %v1041 = vadd.f32 %v1037, 1.0
    %v1042 = vadd.f32 %v1039, 1.0
    %v1043 = vrcp.pop %v1040
    %v1044 = vmul.f32 %v1040, %v1043
    %v1045 = vsub.f32 1.0, %v1044
    %v1046 = vmul.f32 %v1043, %v1045
    %v1047 = vadd.f32 %v1043, %v1046
    %vm1048 = vweird.f32 %v1040
    %vm1049 = vweird.f32 %v1043
    %vm1050 = vmor %vm1048, %vm1049
    %v1051 = vsel %vm1050, %v1043, %v1047
    %v1052 = vand.u32 2147483647, %v1040
    %vm1053 = vcmp.eq.f32.partialorder %v1052, 8.507059e+37
    %v1054 = vand.u32 %v1040, 2147483648
    %v1055 = vor.u32 1.1754944e-38, %v1054
    %v1056 = vsel %vm1053, %v1055, %v1051
    %v1057 = vmul.f32 1.0, %v1056
    %v1058 = vrcp.pop %v1041
    %v1059 = vmul.f32 %v1041, %v1058
    %v1060 = vsub.f32 1.0, %v1059
    %v1061 = vmul.f32 %v1058, %v1060
    %v1062 = vadd.f32 %v1058, %v1061
    %vm1063 = vweird.f32 %v1041
    %vm1064 = vweird.f32 %v1058
    %vm1065 = vmor %vm1063, %vm1064
    %v1066 = vsel %vm1065, %v1058, %v1062
    %v1067 = vand.u32 2147483647, %v1041
    %vm1068 = vcmp.eq.f32.partialorder %v1067, 8.507059e+37
    %v1069 = vand.u32 %v1041, 2147483648
    %v1070 = vor.u32 1.1754944e-38, %v1069
    %v1071 = vsel %vm1068, %v1070, %v1066
    %v1072 = vmul.f32 1.0, %v1071
    %v1073 = vrcp.pop %v1042
    %v1074 = vmul.f32 %v1042, %v1073
    %v1075 = vsub.f32 1.0, %v1074
    %v1076 = vmul.f32 %v1073, %v1075
    %v1077 = vadd.f32 %v1073, %v1076
    %vm1078 = vweird.f32 %v1042
    %vm1079 = vweird.f32 %v1073
    %vm1080 = vmor %vm1078, %vm1079
    %v1081 = vsel %vm1080, %v1073, %v1077
    %v1082 = vand.u32 2147483647, %v1042
    %vm1083 = vcmp.eq.f32.partialorder %v1082, 8.507059e+37
    %v1084 = vand.u32 %v1042, 2147483648
    %v1085 = vor.u32 1.1754944e-38, %v1084
    %v1086 = vsel %vm1083, %v1085, %v1081
    %v1087 = vmul.f32 1.0, %v1086
    %v1088 = vtanh.pop %v1030
    %v1089 = vmul.f32 %v1072, %v971
    %v1090 = vmul.f32 %v1057, %v1088
    %v1091 = vadd.f32 %v1089, %v1090
    %v1092 = vtanh.pop %v1091
    %v1093 = vmul.f32 %v1087, %v1092
    %v1094 = vpack.c.bf16 %v1093, %v1093
    %1095 = vmatpush.bf16.msra.mxu0 %v339
    %1096 = vmatpush.bf16.msra.mxu0 %v335
    %1097 = vmatpush.bf16.msra.mxu0 %v331
    %1098 = vmatpush.bf16.msra.mxu0 %v327
    %1099 = vmatpush.bf16.msra.mxu0 %v323
    %1100 = vmatpush.bf16.msra.mxu0 %v319
    %1101 = vmatpush.bf16.msra.mxu0 %v315
    %1102 = vmatpush.bf16.msra.mxu0 %v311
    %1103 = vmatmul.bf16.gmra.mxu0 %v1094
    %v1104 = vpop.f32.mrf.mxu0
    %v1105 = vadd.f32 0.0, %v1104
    %v1106 = vpop.f32.mrf.mxu0
    %1107 = vdwg.mxu0
    %1108 = vmatpush.bf16.msra.mxu0 %v340
    %1109 = vmatpush.bf16.msra.mxu0 %v336
    %1110 = vmatpush.bf16.msra.mxu0 %v332
    %1111 = vmatpush.bf16.msra.mxu0 %v328
    %1112 = vmatpush.bf16.msra.mxu0 %v324
    %1113 = vmatpush.bf16.msra.mxu0 %v320
    %1114 = vmatpush.bf16.msra.mxu0 %v316
    %1115 = vmatpush.bf16.msra.mxu0 %v312
    %1116 = vmatmul.bf16.gmra.mxu0 %v1094
    %v1117 = vpop.f32.mrf.mxu0
    %v1118 = vadd.f32 0.0, %v1117
    %v1119 = vpop.f32.mrf.mxu0
    %1120 = vdwg.mxu0
    %1121 = vmatpush.bf16.msra.mxu0 %v341
    %1122 = vmatpush.bf16.msra.mxu0 %v337
    %1123 = vmatpush.bf16.msra.mxu0 %v333
    %1124 = vmatpush.bf16.msra.mxu0 %v329
    %1125 = vmatpush.bf16.msra.mxu0 %v325
    %1126 = vmatpush.bf16.msra.mxu0 %v321
    %1127 = vmatpush.bf16.msra.mxu0 %v317
    %1128 = vmatpush.bf16.msra.mxu0 %v313
    %1129 = vmatmul.bf16.gmra.mxu0 %v1094
    %v1130 = vpop.f32.mrf.mxu0
    %v1131 = vadd.f32 0.0, %v1130
    %v1132 = vpop.f32.mrf.mxu0
    %1133 = vdwg.mxu0
    %1134 = vmatpush.bf16.msra.mxu0 %v342
    %1135 = vmatpush.bf16.msra.mxu0 %v338
    %1136 = vmatpush.bf16.msra.mxu0 %v334
    %1137 = vmatpush.bf16.msra.mxu0 %v330
    %1138 = vmatpush.bf16.msra.mxu0 %v326
    %1139 = vmatpush.bf16.msra.mxu0 %v322
    %1140 = vmatpush.bf16.msra.mxu0 %v318
    %1141 = vmatpush.bf16.msra.mxu0 %v314
    %1142 = vmatmul.bf16.gmra.mxu0 %v1094
    %v1143 = vpop.f32.mrf.mxu0
    %v1144 = vadd.f32 0.0, %v1143
    %v1145 = vpop.f32.mrf.mxu0
    %1146 = vdwg.mxu0
    %v1147 = vadd.f32 %v207, %v1105
    %v1148 = vadd.f32 %v208, %v1118
    %v1149 = vadd.f32 %v209, %v1131
    %v1150 = vadd.f32 %v210, %v1144
    %v1151 = vxor.u32 %v1147, 2147483648
    %v1152 = vxor.u32 %v1148, 2147483648
    %v1153 = vxor.u32 %v1149, 2147483648
    %v1154 = vmul.f32 %v1151, 1.442695
    %v1155 = vpow.pop %v1154
    %v1156 = vmul.f32 %v1152, 1.442695
    %v1157 = vpow.pop %v1156
    %v1158 = vmul.f32 %v1153, 1.442695
    %v1159 = vpow.pop %v1158
    %v1160 = vadd.f32 %v1155, 1.0
    %v1161 = vadd.f32 %v1157, 1.0
    %v1162 = vadd.f32 %v1159, 1.0
    %v1163 = vrcp.pop %v1160
    %v1164 = vmul.f32 %v1160, %v1163
    %v1165 = vsub.f32 1.0, %v1164
    %v1166 = vmul.f32 %v1163, %v1165
    %v1167 = vadd.f32 %v1163, %v1166
    %vm1168 = vweird.f32 %v1160
    %vm1169 = vweird.f32 %v1163
    %vm1170 = vmor %vm1168, %vm1169
    %v1171 = vsel %vm1170, %v1163, %v1167
    %v1172 = vand.u32 2147483647, %v1160
    %vm1173 = vcmp.eq.f32.partialorder %v1172, 8.507059e+37
    %v1174 = vand.u32 %v1160, 2147483648
    %v1175 = vor.u32 1.1754944e-38, %v1174
    %v1176 = vsel %vm1173, %v1175, %v1171
    %v1177 = vmul.f32 1.0, %v1176
    %v1178 = vrcp.pop %v1161
    %v1179 = vmul.f32 %v1161, %v1178
    %v1180 = vsub.f32 1.0, %v1179
    %v1181 = vmul.f32 %v1178, %v1180
    %v1182 = vadd.f32 %v1178, %v1181
    %vm1183 = vweird.f32 %v1161
    %vm1184 = vweird.f32 %v1178
    %vm1185 = vmor %vm1183, %vm1184
    %v1186 = vsel %vm1185, %v1178, %v1182
    %v1187 = vand.u32 2147483647, %v1161
    %vm1188 = vcmp.eq.f32.partialorder %v1187, 8.507059e+37
    %v1189 = vand.u32 %v1161, 2147483648
    %v1190 = vor.u32 1.1754944e-38, %v1189
    %v1191 = vsel %vm1188, %v1190, %v1186
    %v1192 = vmul.f32 1.0, %v1191
    %v1193 = vrcp.pop %v1162
    %v1194 = vmul.f32 %v1162, %v1193
    %v1195 = vsub.f32 1.0, %v1194
    %v1196 = vmul.f32 %v1193, %v1195
    %v1197 = vadd.f32 %v1193, %v1196
    %vm1198 = vweird.f32 %v1162
    %vm1199 = vweird.f32 %v1193
    %vm1200 = vmor %vm1198, %vm1199
    %v1201 = vsel %vm1200, %v1193, %v1197
    %v1202 = vand.u32 2147483647, %v1162
    %vm1203 = vcmp.eq.f32.partialorder %v1202, 8.507059e+37
    %v1204 = vand.u32 %v1162, 2147483648
    %v1205 = vor.u32 1.1754944e-38, %v1204
    %v1206 = vsel %vm1203, %v1205, %v1201
    %v1207 = vmul.f32 1.0, %v1206
    %v1208 = vtanh.pop %v1150
    %v1209 = vmul.f32 %v1192, %v1091
    %v1210 = vmul.f32 %v1177, %v1208
    %v1211 = vadd.f32 %v1209, %v1210
    %v1212 = vtanh.pop %v1211
    %v1213 = vmul.f32 %v1207, %v1212
    %v1214 = vpack.c.bf16 %v1213, %v1213
    %1215 = vmatpush.bf16.msra.mxu0 %v339
    %1216 = vmatpush.bf16.msra.mxu0 %v335
    %1217 = vmatpush.bf16.msra.mxu0 %v331
    %1218 = vmatpush.bf16.msra.mxu0 %v327
    %1219 = vmatpush.bf16.msra.mxu0 %v323
    %1220 = vmatpush.bf16.msra.mxu0 %v319
    %1221 = vmatpush.bf16.msra.mxu0 %v315
    %1222 = vmatpush.bf16.msra.mxu0 %v311
    %1223 = vmatmul.bf16.gmra.mxu0 %v1214
    %v1224 = vpop.f32.mrf.mxu0
    %v1225 = vadd.f32 0.0, %v1224
    %v1226 = vpop.f32.mrf.mxu0
    %1227 = vdwg.mxu0
    %1228 = vmatpush.bf16.msra.mxu0 %v340
    %1229 = vmatpush.bf16.msra.mxu0 %v336
    %1230 = vmatpush.bf16.msra.mxu0 %v332
    %1231 = vmatpush.bf16.msra.mxu0 %v328
    %1232 = vmatpush.bf16.msra.mxu0 %v324
    %1233 = vmatpush.bf16.msra.mxu0 %v320
    %1234 = vmatpush.bf16.msra.mxu0 %v316
    %1235 = vmatpush.bf16.msra.mxu0 %v312
    %1236 = vmatmul.bf16.gmra.mxu0 %v1214
    %v1237 = vpop.f32.mrf.mxu0
    %v1238 = vadd.f32 0.0, %v1237
    %v1239 = vpop.f32.mrf.mxu0
    %1240 = vdwg.mxu0
    %1241 = vmatpush.bf16.msra.mxu0 %v341
    %1242 = vmatpush.bf16.msra.mxu0 %v337
    %1243 = vmatpush.bf16.msra.mxu0 %v333
    %1244 = vmatpush.bf16.msra.mxu0 %v329
    %1245 = vmatpush.bf16.msra.mxu0 %v325
    %1246 = vmatpush.bf16.msra.mxu0 %v321
    %1247 = vmatpush.bf16.msra.mxu0 %v317
    %1248 = vmatpush.bf16.msra.mxu0 %v313
    %1249 = vmatmul.bf16.gmra.mxu0 %v1214
    %v1250 = vpop.f32.mrf.mxu0
    %v1251 = vadd.f32 0.0, %v1250
    %v1252 = vpop.f32.mrf.mxu0
    %1253 = vdwg.mxu0
    %1254 = vmatpush.bf16.msra.mxu0 %v342
    %1255 = vmatpush.bf16.msra.mxu0 %v338
    %1256 = vmatpush.bf16.msra.mxu0 %v334
    %1257 = vmatpush.bf16.msra.mxu0 %v330
    %1258 = vmatpush.bf16.msra.mxu0 %v326
    %1259 = vmatpush.bf16.msra.mxu0 %v322
    %1260 = vmatpush.bf16.msra.mxu0 %v318
    %1261 = vmatpush.bf16.msra.mxu0 %v314
    %1262 = vmatmul.bf16.gmra.mxu0 %v1214
    %v1263 = vpop.f32.mrf.mxu0
    %v1264 = vadd.f32 0.0, %v1263
    %v1265 = vpop.f32.mrf.mxu0
    %1266 = vdwg.mxu0
    %v1267 = vadd.f32 %v211, %v1225
    %v1268 = vadd.f32 %v212, %v1238
    %v1269 = vadd.f32 %v213, %v1251
    %v1270 = vadd.f32 %v214, %v1264
    %v1271 = vxor.u32 %v1267, 2147483648
    %v1272 = vxor.u32 %v1268, 2147483648
    %v1273 = vxor.u32 %v1269, 2147483648
    %v1274 = vmul.f32 %v1271, 1.442695
    %v1275 = vpow.pop %v1274
    %v1276 = vmul.f32 %v1272, 1.442695
    %v1277 = vpow.pop %v1276
    %v1278 = vmul.f32 %v1273, 1.442695
    %v1279 = vpow.pop %v1278
    %v1280 = vadd.f32 %v1275, 1.0
    %v1281 = vadd.f32 %v1277, 1.0
    %v1282 = vadd.f32 %v1279, 1.0
    %v1283 = vrcp.pop %v1280
    %v1284 = vmul.f32 %v1280, %v1283
    %v1285 = vsub.f32 1.0, %v1284
    %v1286 = vmul.f32 %v1283, %v1285
    %v1287 = vadd.f32 %v1283, %v1286
    %vm1288 = vweird.f32 %v1280
    %vm1289 = vweird.f32 %v1283
    %vm1290 = vmor %vm1288, %vm1289
    %v1291 = vsel %vm1290, %v1283, %v1287
    %v1292 = vand.u32 2147483647, %v1280
    %vm1293 = vcmp.eq.f32.partialorder %v1292, 8.507059e+37
    %v1294 = vand.u32 %v1280, 2147483648
    %v1295 = vor.u32 1.1754944e-38, %v1294
    %v1296 = vsel %vm1293, %v1295, %v1291
    %v1297 = vmul.f32 1.0, %v1296
    %v1298 = vrcp.pop %v1281
    %v1299 = vmul.f32 %v1281, %v1298
    %v1300 = vsub.f32 1.0, %v1299
    %v1301 = vmul.f32 %v1298, %v1300
    %v1302 = vadd.f32 %v1298, %v1301
    %vm1303 = vweird.f32 %v1281
    %vm1304 = vweird.f32 %v1298
    %vm1305 = vmor %vm1303, %vm1304
    %v1306 = vsel %vm1305, %v1298, %v1302
    %v1307 = vand.u32 2147483647, %v1281
    %vm1308 = vcmp.eq.f32.partialorder %v1307, 8.507059e+37
    %v1309 = vand.u32 %v1281, 2147483648
    %v1310 = vor.u32 1.1754944e-38, %v1309
    %v1311 = vsel %vm1308, %v1310, %v1306
    %v1312 = vmul.f32 1.0, %v1311
    %v1313 = vrcp.pop %v1282
    %v1314 = vmul.f32 %v1282, %v1313
    %v1315 = vsub.f32 1.0, %v1314
    %v1316 = vmul.f32 %v1313, %v1315
    %v1317 = vadd.f32 %v1313, %v1316
    %vm1318 = vweird.f32 %v1282
    %vm1319 = vweird.f32 %v1313
    %vm1320 = vmor %vm1318, %vm1319
    %v1321 = vsel %vm1320, %v1313, %v1317
    %v1322 = vand.u32 2147483647, %v1282
    %vm1323 = vcmp.eq.f32.partialorder %v1322, 8.507059e+37
    %v1324 = vand.u32 %v1282, 2147483648
    %v1325 = vor.u32 1.1754944e-38, %v1324
    %v1326 = vsel %vm1323, %v1325, %v1321
    %v1327 = vmul.f32 1.0, %v1326
    %v1328 = vtanh.pop %v1270
    %v1329 = vmul.f32 %v1312, %v1211
    %v1330 = vmul.f32 %v1297, %v1328
    %v1331 = vadd.f32 %v1329, %v1330
    %v1332 = vtanh.pop %v1331
    %v1333 = vmul.f32 %v1327, %v1332
    %v1334 = vld [vmem:[%s4] sm:$0x1]
    %v1336 = vperm.slane %v1334, 0
    %v1338 = vmul.f32 %v1333, %v1336
    %vm1339 = vcmask 1041408
    %v1340 = vsel %vm1339, %v1338, 0.0
    %1341 = vadd.xlane.f32.xlu0 %v1340
    %v1342 = vpop.xlane.xlu0 %1341
    %v1343 = vld [vmem:[#allocation2] sm:$0x1]
    %v1345 = vperm.slane %v1343, 0
    %v1347 = vadd.f32 %v1342, %v1345
    %vm1348 = vcmask 1024
    %1349 = vst.msk [vmem:[%s6] sm:$0x3] %vm1348, %v1347
    // Predicated region
    $region30: #{lstm_model_forward.1} parent=1 // pred_check
      _
    $region31: #{lstm_model_forward.1} parent=1 // pred_check_branch
      %1351 = sbr.rel (0) target = $region33
    $region32: #{lstm_model_forward.1} parent=1 // pred_region
      _
    $region33: #{lstm_model_forward.1} parent=1 // pred_fallthru
      _
    // Predicated region
    $region34: #{lstm_model_forward.1} parent=1 // pred_check
      _
    $region35: #{lstm_model_forward.1} parent=1 // pred_check_branch
      %1353 = sbr.rel (0) target = $region37
    $region36: #{lstm_model_forward.1} parent=1 // pred_region
      _
    $region37: #{lstm_model_forward.1} parent=1 // pred_fallthru
      _
    %1354 = vsyncpa [#allocation4], 1

</llo_original>
